<compile_context>
chip_gen: v5e
topology: v5e:2x2
jax: 0.10.0
libtpu: 0.0.40
codegen_flags: <defaults>
</compile_context>

<pallas_src>
import functools

import jax
import jax.numpy as jnp
from jax.experimental import pallas as pl
from jax.experimental.pallas import tpu as pltpu

EPS = 1e-5          # nn.InstanceNorm2d default
NEG_SLOPE = 0.01    # nn.LeakyReLU default


# ----------------------------------------------------------------------------
# Kernel: one batch sample per grid step.
#   x_ref: (1, C_in, Hp*Wp)   padded+upsampled input, spatial flattened
#   w_ref: (KH*KW, C_out, C_in) conv weight, taps-major
#   g_ref: (C_out, 1)         instance-norm gamma
#   b_ref: (C_out, 1)         instance-norm beta
#   m_ref: (1, Pp)            f32 valid-column mask (1 where (q % Wp) < OW)
#   o_ref: (1, C_out, Pp)     output on the padded-width grid (lane-dense)
# ----------------------------------------------------------------------------
def _conv_dec_kernel(x_ref, w_ref, g_ref, b_ref, m_ref, o_ref, *,
                     c_out, kh_sz, kw_sz, wp, pp, n_valid):
    xf = x_ref[0]                                   # (C_in, Hp*Wp) f32

    # Conv2d(bias=False) as KH*KW accumulated MXU matmuls over contiguous
    # shifted views of the flattened padded input (in-kernel im2col).
    acc = jnp.zeros((c_out, pp), dtype=jnp.float32)
    for kh in range(kh_sz):
        for kw in range(kw_sz):
            off = kh * wp + kw
            xs = xf[:, off:off + pp].astype(jnp.bfloat16)      # (C_in, Pp)
            wk = w_ref[kh * kw_sz + kw].astype(jnp.bfloat16)   # (C_out, C_in)
            acc = acc + jnp.dot(wk, xs, preferred_element_type=jnp.float32)

    # InstanceNorm2d statistics over the valid spatial positions only (f32).
    m = m_ref[...]                                  # (1, Pp)
    inv_cnt = 1.0 / float(n_valid)
    mean = jnp.sum(acc * m, axis=1, keepdims=True) * inv_cnt        # (C_out,1)
    diff = (acc - mean) * m
    var = jnp.sum(diff * diff, axis=1, keepdims=True) * inv_cnt     # (C_out,1)

    # Affine folded into one per-channel scale/shift (computed once per
    # sample, EUP rsqrt), then LeakyReLU.  Invalid columns get harmless
    # garbage: they never enter the statistics and are cropped in the wrapper.
    scale = g_ref[...] * jax.lax.rsqrt(var + EPS)   # (C_out, 1)
    shift = b_ref[...] - mean * scale               # (C_out, 1)
    z = acc * scale + shift
    o_ref[0] = jnp.where(z > 0, z, NEG_SLOPE * z).astype(o_ref.dtype)


# ----------------------------------------------------------------------------
# Wrapper
# ----------------------------------------------------------------------------
def conv_dec_forward(x, weight, gamma, beta, scale=2):
    """x: (N, C_in, H, W) NCHW; weight: (C_out, C_in, KH, KW) OIHW."""
    n, c_in, h, w = x.shape
    c_out, c_in_w, kh_sz, kw_sz = weight.shape
    assert c_in_w == c_in

    hu, wu = scale * h, scale * w            # after nearest upsample
    hp, wp = hu + 2, wu + 2                  # after ReflectionPad2d(1)
    oh, ow = hp - kh_sz + 1, wp - kw_sz + 1  # valid conv output
    pp = (oh - 1) * wp + ow                  # flat length covering all valid outputs
    l_in = hp * wp
    n_valid = oh * ow

    # Wrapper-side data prep: nearest upsample + reflection pad, flatten spatial.
    xu = jnp.repeat(jnp.repeat(x, scale, axis=2), scale, axis=3)
    xp = jnp.pad(xu, ((0, 0), (0, 0), (1, 1), (1, 1)), mode="reflect")
    x_flat = xp.reshape(n, c_in, l_in).astype(jnp.float32)

    # Weight re-laid out taps-major: w_taps[kh*KW + kw] == weight[:, :, kh, kw].
    w_taps = jnp.transpose(weight, (2, 3, 0, 1)).reshape(
        kh_sz * kw_sz, c_out, c_in).astype(jnp.float32)
    g = gamma.reshape(c_out, 1).astype(jnp.float32)
    b = beta.reshape(c_out, 1).astype(jnp.float32)

    # Valid-column mask on the padded-width output grid.
    q = jnp.arange(pp, dtype=jnp.int32)
    mask = ((q % wp) < ow).astype(jnp.float32).reshape(1, pp)

    kernel = functools.partial(
        _conv_dec_kernel, c_out=c_out, kh_sz=kh_sz, kw_sz=kw_sz,
        wp=wp, pp=pp, n_valid=n_valid)

    flops = 2 * n * c_out * c_in * kh_sz * kw_sz * n_valid
    bytes_accessed = 4 * (x_flat.size + w_taps.size + g.size + b.size
                          + mask.size + n * c_out * pp)

    out_flat = pl.pallas_call(
        kernel,
        out_shape=jax.ShapeDtypeStruct((n, c_out, pp), jnp.float32),
        grid_spec=pltpu.PrefetchScalarGridSpec(
            num_scalar_prefetch=0,
            grid=(n,),
            in_specs=[
                pl.BlockSpec((1, c_in, l_in), lambda i: (i, 0, 0)),
                pl.BlockSpec((kh_sz * kw_sz, c_out, c_in), lambda i: (0, 0, 0)),
                pl.BlockSpec((c_out, 1), lambda i: (0, 0)),
                pl.BlockSpec((c_out, 1), lambda i: (0, 0)),
                pl.BlockSpec((1, pp), lambda i: (0, 0)),
            ],
            out_specs=pl.BlockSpec((1, c_out, pp), lambda i: (i, 0, 0)),
        ),
        compiler_params=pltpu.CompilerParams(
            dimension_semantics=("parallel",),
            vmem_limit_bytes=32 * 1024 * 1024),
        cost_estimate=pl.CostEstimate(
            flops=flops, transcendentals=n * c_out,
            bytes_accessed=bytes_accessed),
    )(x_flat, w_taps, g, b, mask)

    # Crop padded-width columns -> (N, C_out, OH, OW); already NCHW, no transpose.
    tail = oh * wp - pp
    out = jnp.pad(out_flat, ((0, 0), (0, 0), (0, tail)))
    return out.reshape(n, c_out, oh, wp)[:, :, :, :ow]


# ----------------------------------------------------------------------------
# Pure-JAX reference (for correctness checks)
# ----------------------------------------------------------------------------
def conv_dec_ref(x, weight, gamma, beta, scale=2, bf16_operands=False):
    xu = jnp.repeat(jnp.repeat(x, scale, axis=2), scale, axis=3)
    xp = jnp.pad(xu, ((0, 0), (0, 0), (1, 1), (1, 1)), mode="reflect")
    lhs, rhs = xp, weight
    if bf16_operands:
        lhs = lhs.astype(jnp.bfloat16)
        rhs = rhs.astype(jnp.bfloat16)
    y = jax.lax.conv_general_dilated(
        lhs, rhs, window_strides=(1, 1), padding="VALID",
        dimension_numbers=("NCHW", "OIHW", "NCHW"),
        preferred_element_type=jnp.float32)
    mean = jnp.mean(y, axis=(2, 3), keepdims=True)
    var = jnp.mean(jnp.square(y - mean), axis=(2, 3), keepdims=True)
    y_hat = (y - mean) * jax.lax.rsqrt(var + EPS)
    z = y_hat * gamma.reshape(1, -1, 1, 1) + beta.reshape(1, -1, 1, 1)
    return jnp.where(z > 0, z, NEG_SLOPE * z)


if __name__ == "__main__":
    # ConvDec(c_in=4, c_out=8, kernel=3) on a (2, 4, 16, 16) input.
    batch, c_in, c_out, H, W = 2, 4, 8, 16, 16
    kernel_size, up_scale = 3, 2

    key = jax.random.PRNGKey(0)
    kx, kw_, kg, kb = jax.random.split(key, 4)
    x = jax.random.normal(kx, (batch, c_in, H, W), dtype=jnp.float32)
    weight = 0.1 * jax.random.normal(
        kw_, (c_out, c_in, kernel_size, kernel_size), dtype=jnp.float32)
    # (PyTorch init is gamma=1, beta=0; perturb to exercise the affine path.)
    gamma = 1.0 + 0.1 * jax.random.normal(kg, (c_out,), dtype=jnp.float32)
    beta = 0.1 * jax.random.normal(kb, (c_out,), dtype=jnp.float32)

    out = jax.block_until_ready(
        conv_dec_forward(x, weight, gamma, beta, scale=up_scale))
    assert out.shape == (batch, c_out, up_scale * H, up_scale * W), out.shape

    # Primary check: reference with the same bf16-operand / f32-accumulation
    # arithmetic as the kernel's MXU matmuls (tight tolerance).
    ref_bf16 = jax.block_until_ready(
        conv_dec_ref(x, weight, gamma, beta, scale=up_scale, bf16_operands=True))
    assert jnp.allclose(out, ref_bf16, rtol=2e-3, atol=2e-3), (
        f"max abs diff vs bf16-operand ref: {jnp.max(jnp.abs(out - ref_bf16))}")

    # Sanity check against the full-f32 reference (difference is only the
    # bf16 operand quantization of the conv).
    ref_f32 = jax.block_until_ready(
        conv_dec_ref(x, weight, gamma, beta, scale=up_scale, bf16_operands=False))
    assert jnp.allclose(out, ref_f32, rtol=5e-2, atol=5e-2), (
        f"max abs diff vs f32 ref: {jnp.max(jnp.abs(out - ref_f32))}")

    print("KERNEL_OK")
</pallas_src>

<mosaic_0001>
module attributes {stable_mosaic.version = 11 : i64} {
  func.func @_conv_dec_kernel(%arg0: i32, %arg1: memref<1x4x1156xf32, #tpu.memory_space<vmem>>, %arg2: memref<9x8x4xf32, #tpu.memory_space<vmem>>, %arg3: memref<8x1xf32, #tpu.memory_space<vmem>>, %arg4: memref<8x1xf32, #tpu.memory_space<vmem>>, %arg5: memref<1x1086xf32, #tpu.memory_space<vmem>>, %arg6: memref<1x8x1086xf32, #tpu.memory_space<vmem>>) attributes {dimension_semantics = [#tpu.dimension_semantics<parallel>], iteration_bounds = array<i64: 2>, scalar_prefetch = 0 : i64, scratch_operands = 0 : i64, tpu.core_type = #tpu.core_type<tc>, window_params = [{transform_indices = @transform_0, window_bounds = array<i64: 1, 4, 1156>}, {pipeline_mode = #tpu.pipeline_mode<synchronous>, transform_indices = @transform_1, window_bounds = array<i64: 9, 8, 4>}, {pipeline_mode = #tpu.pipeline_mode<synchronous>, transform_indices = @transform_2, window_bounds = array<i64: 8, 1>}, {pipeline_mode = #tpu.pipeline_mode<synchronous>, transform_indices = @transform_3, window_bounds = array<i64: 8, 1>}, {pipeline_mode = #tpu.pipeline_mode<synchronous>, transform_indices = @transform_4, window_bounds = array<i64: 1, 1086>}, {transform_indices = @transform_5, window_bounds = array<i64: 1, 8, 1086>}]} {
    %c0 = arith.constant 0 : index
    %c0_0 = arith.constant 0 : index
    %c0_1 = arith.constant 0 : index
    %0 = vector.load %arg1[%c0, %c0_0, %c0_1] : memref<1x4x1156xf32, #tpu.memory_space<vmem>>, vector<1x4x1156xf32>
    %1 = vector.shape_cast %0 : vector<1x4x1156xf32> to vector<4x1156xf32>
    %cst = arith.constant 0.000000e+00 : f32
    %2 = vector.broadcast %cst : f32 to vector<8x1086xf32>
    %3 = vector.extract_strided_slice %1 {offsets = [0, 0], sizes = [4, 1086], strides = [1, 1]} : vector<4x1156xf32> to vector<4x1086xf32>
    %4 = arith.truncf %3 : vector<4x1086xf32> to vector<4x1086xbf16>
    %c0_2 = arith.constant 0 : index
    %c0_3 = arith.constant 0 : index
    %c0_4 = arith.constant 0 : index
    %5 = vector.load %arg2[%c0_2, %c0_3, %c0_4] : memref<9x8x4xf32, #tpu.memory_space<vmem>>, vector<1x8x4xf32>
    %6 = vector.shape_cast %5 : vector<1x8x4xf32> to vector<8x4xf32>
    %7 = arith.truncf %6 : vector<8x4xf32> to vector<8x4xbf16>
    %cst_5 = arith.constant dense<0.000000e+00> : vector<8x1086xf32>
    %8 = tpu.matmul %7, %4, %cst_5 {dimension_numbers = #tpu.dot_dimension_numbers<[1], [0], [0], [1], [0, 0, 1, 1], [], []>} : vector<8x4xbf16>, vector<4x1086xbf16>, vector<8x1086xf32> -> vector<8x1086xf32>
    %9 = arith.addf %2, %8 : vector<8x1086xf32>
    %10 = vector.extract_strided_slice %1 {offsets = [0, 1], sizes = [4, 1086], strides = [1, 1]} : vector<4x1156xf32> to vector<4x1086xf32>
    %11 = arith.truncf %10 : vector<4x1086xf32> to vector<4x1086xbf16>
    %c1 = arith.constant 1 : index
    %c0_6 = arith.constant 0 : index
    %c0_7 = arith.constant 0 : index
    %12 = vector.load %arg2[%c1, %c0_6, %c0_7] : memref<9x8x4xf32, #tpu.memory_space<vmem>>, vector<1x8x4xf32>
    %13 = vector.shape_cast %12 : vector<1x8x4xf32> to vector<8x4xf32>
    %14 = arith.truncf %13 : vector<8x4xf32> to vector<8x4xbf16>
    %cst_8 = arith.constant dense<0.000000e+00> : vector<8x1086xf32>
    %15 = tpu.matmul %14, %11, %cst_8 {dimension_numbers = #tpu.dot_dimension_numbers<[1], [0], [0], [1], [0, 0, 1, 1], [], []>} : vector<8x4xbf16>, vector<4x1086xbf16>, vector<8x1086xf32> -> vector<8x1086xf32>
    %16 = arith.addf %9, %15 : vector<8x1086xf32>
    %17 = vector.extract_strided_slice %1 {offsets = [0, 2], sizes = [4, 1086], strides = [1, 1]} : vector<4x1156xf32> to vector<4x1086xf32>
    %18 = arith.truncf %17 : vector<4x1086xf32> to vector<4x1086xbf16>
    %c2 = arith.constant 2 : index
    %c0_9 = arith.constant 0 : index
    %c0_10 = arith.constant 0 : index
    %19 = vector.load %arg2[%c2, %c0_9, %c0_10] : memref<9x8x4xf32, #tpu.memory_space<vmem>>, vector<1x8x4xf32>
    %20 = vector.shape_cast %19 : vector<1x8x4xf32> to vector<8x4xf32>
    %21 = arith.truncf %20 : vector<8x4xf32> to vector<8x4xbf16>
    %cst_11 = arith.constant dense<0.000000e+00> : vector<8x1086xf32>
    %22 = tpu.matmul %21, %18, %cst_11 {dimension_numbers = #tpu.dot_dimension_numbers<[1], [0], [0], [1], [0, 0, 1, 1], [], []>} : vector<8x4xbf16>, vector<4x1086xbf16>, vector<8x1086xf32> -> vector<8x1086xf32>
    %23 = arith.addf %16, %22 : vector<8x1086xf32>
    %24 = vector.extract_strided_slice %1 {offsets = [0, 34], sizes = [4, 1086], strides = [1, 1]} : vector<4x1156xf32> to vector<4x1086xf32>
    %25 = arith.truncf %24 : vector<4x1086xf32> to vector<4x1086xbf16>
    %c3 = arith.constant 3 : index
    %c0_12 = arith.constant 0 : index
    %c0_13 = arith.constant 0 : index
    %26 = vector.load %arg2[%c3, %c0_12, %c0_13] : memref<9x8x4xf32, #tpu.memory_space<vmem>>, vector<1x8x4xf32>
    %27 = vector.shape_cast %26 : vector<1x8x4xf32> to vector<8x4xf32>
    %28 = arith.truncf %27 : vector<8x4xf32> to vector<8x4xbf16>
    %cst_14 = arith.constant dense<0.000000e+00> : vector<8x1086xf32>
    %29 = tpu.matmul %28, %25, %cst_14 {dimension_numbers = #tpu.dot_dimension_numbers<[1], [0], [0], [1], [0, 0, 1, 1], [], []>} : vector<8x4xbf16>, vector<4x1086xbf16>, vector<8x1086xf32> -> vector<8x1086xf32>
    %30 = arith.addf %23, %29 : vector<8x1086xf32>
    %31 = vector.extract_strided_slice %1 {offsets = [0, 35], sizes = [4, 1086], strides = [1, 1]} : vector<4x1156xf32> to vector<4x1086xf32>
    %32 = arith.truncf %31 : vector<4x1086xf32> to vector<4x1086xbf16>
    %c4 = arith.constant 4 : index
    %c0_15 = arith.constant 0 : index
    %c0_16 = arith.constant 0 : index
    %33 = vector.load %arg2[%c4, %c0_15, %c0_16] : memref<9x8x4xf32, #tpu.memory_space<vmem>>, vector<1x8x4xf32>
    %34 = vector.shape_cast %33 : vector<1x8x4xf32> to vector<8x4xf32>
    %35 = arith.truncf %34 : vector<8x4xf32> to vector<8x4xbf16>
    %cst_17 = arith.constant dense<0.000000e+00> : vector<8x1086xf32>
    %36 = tpu.matmul %35, %32, %cst_17 {dimension_numbers = #tpu.dot_dimension_numbers<[1], [0], [0], [1], [0, 0, 1, 1], [], []>} : vector<8x4xbf16>, vector<4x1086xbf16>, vector<8x1086xf32> -> vector<8x1086xf32>
    %37 = arith.addf %30, %36 : vector<8x1086xf32>
    %38 = vector.extract_strided_slice %1 {offsets = [0, 36], sizes = [4, 1086], strides = [1, 1]} : vector<4x1156xf32> to vector<4x1086xf32>
    %39 = arith.truncf %38 : vector<4x1086xf32> to vector<4x1086xbf16>
    %c5 = arith.constant 5 : index
    %c0_18 = arith.constant 0 : index
    %c0_19 = arith.constant 0 : index
    %40 = vector.load %arg2[%c5, %c0_18, %c0_19] : memref<9x8x4xf32, #tpu.memory_space<vmem>>, vector<1x8x4xf32>
    %41 = vector.shape_cast %40 : vector<1x8x4xf32> to vector<8x4xf32>
    %42 = arith.truncf %41 : vector<8x4xf32> to vector<8x4xbf16>
    %cst_20 = arith.constant dense<0.000000e+00> : vector<8x1086xf32>
    %43 = tpu.matmul %42, %39, %cst_20 {dimension_numbers = #tpu.dot_dimension_numbers<[1], [0], [0], [1], [0, 0, 1, 1], [], []>} : vector<8x4xbf16>, vector<4x1086xbf16>, vector<8x1086xf32> -> vector<8x1086xf32>
    %44 = arith.addf %37, %43 : vector<8x1086xf32>
    %45 = vector.extract_strided_slice %1 {offsets = [0, 68], sizes = [4, 1086], strides = [1, 1]} : vector<4x1156xf32> to vector<4x1086xf32>
    %46 = arith.truncf %45 : vector<4x1086xf32> to vector<4x1086xbf16>
    %c6 = arith.constant 6 : index
    %c0_21 = arith.constant 0 : index
    %c0_22 = arith.constant 0 : index
    %47 = vector.load %arg2[%c6, %c0_21, %c0_22] : memref<9x8x4xf32, #tpu.memory_space<vmem>>, vector<1x8x4xf32>
    %48 = vector.shape_cast %47 : vector<1x8x4xf32> to vector<8x4xf32>
    %49 = arith.truncf %48 : vector<8x4xf32> to vector<8x4xbf16>
    %cst_23 = arith.constant dense<0.000000e+00> : vector<8x1086xf32>
    %50 = tpu.matmul %49, %46, %cst_23 {dimension_numbers = #tpu.dot_dimension_numbers<[1], [0], [0], [1], [0, 0, 1, 1], [], []>} : vector<8x4xbf16>, vector<4x1086xbf16>, vector<8x1086xf32> -> vector<8x1086xf32>
    %51 = arith.addf %44, %50 : vector<8x1086xf32>
    %52 = vector.extract_strided_slice %1 {offsets = [0, 69], sizes = [4, 1086], strides = [1, 1]} : vector<4x1156xf32> to vector<4x1086xf32>
    %53 = arith.truncf %52 : vector<4x1086xf32> to vector<4x1086xbf16>
    %c7 = arith.constant 7 : index
    %c0_24 = arith.constant 0 : index
    %c0_25 = arith.constant 0 : index
    %54 = vector.load %arg2[%c7, %c0_24, %c0_25] : memref<9x8x4xf32, #tpu.memory_space<vmem>>, vector<1x8x4xf32>
    %55 = vector.shape_cast %54 : vector<1x8x4xf32> to vector<8x4xf32>
    %56 = arith.truncf %55 : vector<8x4xf32> to vector<8x4xbf16>
    %cst_26 = arith.constant dense<0.000000e+00> : vector<8x1086xf32>
    %57 = tpu.matmul %56, %53, %cst_26 {dimension_numbers = #tpu.dot_dimension_numbers<[1], [0], [0], [1], [0, 0, 1, 1], [], []>} : vector<8x4xbf16>, vector<4x1086xbf16>, vector<8x1086xf32> -> vector<8x1086xf32>
    %58 = arith.addf %51, %57 : vector<8x1086xf32>
    %59 = vector.extract_strided_slice %1 {offsets = [0, 70], sizes = [4, 1086], strides = [1, 1]} : vector<4x1156xf32> to vector<4x1086xf32>
    %60 = arith.truncf %59 : vector<4x1086xf32> to vector<4x1086xbf16>
    %c8 = arith.constant 8 : index
    %c0_27 = arith.constant 0 : index
    %c0_28 = arith.constant 0 : index
    %61 = vector.load %arg2[%c8, %c0_27, %c0_28] : memref<9x8x4xf32, #tpu.memory_space<vmem>>, vector<1x8x4xf32>
    %62 = vector.shape_cast %61 : vector<1x8x4xf32> to vector<8x4xf32>
    %63 = arith.truncf %62 : vector<8x4xf32> to vector<8x4xbf16>
    %cst_29 = arith.constant dense<0.000000e+00> : vector<8x1086xf32>
    %64 = tpu.matmul %63, %60, %cst_29 {dimension_numbers = #tpu.dot_dimension_numbers<[1], [0], [0], [1], [0, 0, 1, 1], [], []>} : vector<8x4xbf16>, vector<4x1086xbf16>, vector<8x1086xf32> -> vector<8x1086xf32>
    %65 = arith.addf %58, %64 : vector<8x1086xf32>
    %c0_30 = arith.constant 0 : index
    %c0_31 = arith.constant 0 : index
    %66 = vector.load %arg5[%c0_30, %c0_31] : memref<1x1086xf32, #tpu.memory_space<vmem>>, vector<1x1086xf32>
    %67 = vector.broadcast %66 : vector<1x1086xf32> to vector<8x1086xf32>
    %68 = arith.mulf %65, %67 : vector<8x1086xf32>
    %cst_32 = arith.constant dense<0.000000e+00> : vector<8xf32>
    %69 = vector.multi_reduction <add>, %68, %cst_32 [1] : vector<8x1086xf32> to vector<8xf32>
    %70 = vector.shape_cast %69 : vector<8xf32> to vector<8x1xf32>
    %cst_33 = arith.constant 9.765625E-4 : f32
    %71 = vector.broadcast %cst_33 : f32 to vector<8x1xf32>
    %72 = arith.mulf %70, %71 : vector<8x1xf32>
    %73 = vector.broadcast %72 : vector<8x1xf32> to vector<8x1086xf32>
    %74 = arith.subf %65, %73 : vector<8x1086xf32>
    %75 = vector.broadcast %66 : vector<1x1086xf32> to vector<8x1086xf32>
    %76 = arith.mulf %74, %75 : vector<8x1086xf32>
    %77 = arith.mulf %76, %76 : vector<8x1086xf32>
    %cst_34 = arith.constant dense<0.000000e+00> : vector<8xf32>
    %78 = vector.multi_reduction <add>, %77, %cst_34 [1] : vector<8x1086xf32> to vector<8xf32>
    %79 = vector.shape_cast %78 : vector<8xf32> to vector<8x1xf32>
    %cst_35 = arith.constant 9.765625E-4 : f32
    %80 = vector.broadcast %cst_35 : f32 to vector<8x1xf32>
    %81 = arith.mulf %79, %80 : vector<8x1xf32>
    %c0_36 = arith.constant 0 : index
    %c0_37 = arith.constant 0 : index
    %82 = vector.load %arg3[%c0_36, %c0_37] : memref<8x1xf32, #tpu.memory_space<vmem>>, vector<8x1xf32>
    %cst_38 = arith.constant 9.99999974E-6 : f32
    %83 = vector.broadcast %cst_38 : f32 to vector<8x1xf32>
    %84 = arith.addf %81, %83 : vector<8x1xf32>
    %85 = math.rsqrt %84 : vector<8x1xf32>
    %86 = arith.mulf %82, %85 : vector<8x1xf32>
    %c0_39 = arith.constant 0 : index
    %c0_40 = arith.constant 0 : index
    %87 = vector.load %arg4[%c0_39, %c0_40] : memref<8x1xf32, #tpu.memory_space<vmem>>, vector<8x1xf32>
    %88 = arith.mulf %72, %86 : vector<8x1xf32>
    %89 = arith.subf %87, %88 : vector<8x1xf32>
    %90 = vector.broadcast %86 : vector<8x1xf32> to vector<8x1086xf32>
    %91 = arith.mulf %65, %90 : vector<8x1086xf32>
    %92 = vector.broadcast %89 : vector<8x1xf32> to vector<8x1086xf32>
    %93 = arith.addf %91, %92 : vector<8x1086xf32>
    %cst_41 = arith.constant 0.000000e+00 : f32
    %94 = vector.broadcast %cst_41 : f32 to vector<8x1086xf32>
    %95 = arith.cmpf ogt, %93, %94 : vector<8x1086xf32>
    %cst_42 = arith.constant 0.00999999977 : f32
    %96 = vector.broadcast %cst_42 : f32 to vector<8x1086xf32>
    %97 = arith.mulf %96, %93 : vector<8x1086xf32>
    %98 = arith.select %95, %93, %97 : vector<8x1086xi1>, vector<8x1086xf32>
    %c0_43 = arith.constant 0 : index
    %c0_44 = arith.constant 0 : index
    %c0_45 = arith.constant 0 : index
    %99 = vector.load %arg6[%c0_43, %c0_44, %c0_45] : memref<1x8x1086xf32, #tpu.memory_space<vmem>>, vector<1x8x1086xf32>
    %100 = vector.shape_cast %99 : vector<1x8x1086xf32> to vector<8x1086xf32>
    %101 = vector.shape_cast %98 : vector<8x1086xf32> to vector<1x8x1086xf32>
    tpu.vector_store %arg6[%c0_43, %c0_44, %c0_45], %101 {strides = array<i32>} : memref<1x8x1086xf32, #tpu.memory_space<vmem>>, vector<1x8x1086xf32>,
    return
  }
  func.func @transform_0(%arg0: i32) -> (i32, i32, i32) {
    %c0_i32 = arith.constant 0 : i32
    %c0_i32_0 = arith.constant 0 : i32
    %c0_i32_1 = arith.constant 0 : i32
    return %arg0, %c0_i32, %c0_i32_0 : i32, i32, i32
  }
  func.func @transform_1(%arg0: i32) -> (i32, i32, i32) {
    %c0_i32 = arith.constant 0 : i32
    %c0_i32_0 = arith.constant 0 : i32
    %c0_i32_1 = arith.constant 0 : i32
    %c0_i32_2 = arith.constant 0 : i32
    return %c0_i32, %c0_i32_0, %c0_i32_1 : i32, i32, i32
  }
  func.func @transform_2(%arg0: i32) -> (i32, i32) {
    %c0_i32 = arith.constant 0 : i32
    %c0_i32_0 = arith.constant 0 : i32
    %c0_i32_1 = arith.constant 0 : i32
    return %c0_i32, %c0_i32_0 : i32, i32
  }
  func.func @transform_3(%arg0: i32) -> (i32, i32) {
    %c0_i32 = arith.constant 0 : i32
    %c0_i32_0 = arith.constant 0 : i32
    %c0_i32_1 = arith.constant 0 : i32
    return %c0_i32, %c0_i32_0 : i32, i32
  }
  func.func @transform_4(%arg0: i32) -> (i32, i32) {
    %c0_i32 = arith.constant 0 : i32
    %c0_i32_0 = arith.constant 0 : i32
    %c0_i32_1 = arith.constant 0 : i32
    return %c0_i32, %c0_i32_0 : i32, i32
  }
  func.func @transform_5(%arg0: i32) -> (i32, i32, i32) {
    %c0_i32 = arith.constant 0 : i32
    %c0_i32_0 = arith.constant 0 : i32
    %c0_i32_1 = arith.constant 0 : i32
    return %arg0, %c0_i32, %c0_i32_0 : i32, i32, i32
  }
}

</mosaic_0001>

<llo_original>
// kernel: tpu_custom_call.1
$region0: #{tpu_custom_call.1}
  #allocation0 [shape = 'u32[]', space=smem, size = 0x4, offset = 0x4, fixed_abs, tag = 'smem constant byte address 0x4 - core index']
  #allocation1 [shape = 'u32[72,128]{1,0:T(1,128)}', space=vmem, size = 0x9000, scoped, tag = 'internal scratch']
  %s0 = inlined_call_operand.vmem [shape: f32[2,4,1156], index: 0, kind: input, shape index: {}]
  %s1 = inlined_call_operand.vmem [shape: f32[9,8,4], index: 1, kind: input, shape index: {}]
  %s2 = inlined_call_operand.vmem [shape: f32[8,1], index: 2, kind: input, shape index: {}]
  %s3 = inlined_call_operand.vmem [shape: f32[8,1], index: 3, kind: input, shape index: {}]
  %s4 = inlined_call_operand.vmem [shape: f32[1,1086], index: 4, kind: input, shape index: {}]
  %s5 = inlined_call_operand.hbm [shape: f32[2,8,1086], index: 5, kind: output, shape index: {}]
  %s6 = sld [smem:[#allocation0]]
  $region53: #{tpu_custom_call.1} parent=0
    _
  %s8 = ssub.s32 1, %s6
  %s9 = scalar_select 0, %s8, %s6
  $region1: #{tpu_custom_call.1} parent=0
    #allocation2 [shape = 'u8[73728]{0}', space=vmem, size = 0x12000, scoped, tag = 'output window, operand 0']
    #allocation3 [shape = 's32[2]{0}', space=sflag, size = 0x8, scoped, tag = 'scoped memory for tpu_custom_call.1']
    %10 = vsyncpa [#allocation3], 0
    %s11 = scalar_lea.sflag [#allocation3], 1
    %12 = vsyncpa %s11, 0
    loop: start=0, step=1, limit=4
    $region2: #{tpu_custom_call.1} parent=1 // loop_pre_header
      _
    $region3: #{tpu_custom_call.1} parent=1 // loop_header
      %s14 = sphi 0, %s18
      %p15 = scmp.ge.s32.totalorder %s14, 4
      %s24 = sphi 0, %s26
      %s27 = sphi 0, %s24
      %s28 = sphi 0, %s27
      %s44 = sphi 0, %s28
      %s48 = sphi 0, %s48
      %s50 = sphi 0, %s48
      %s51 = sphi 0, %s50
      %s65 = sphi 0, %s51
      %s69 = sphi 0, %s69
      %s71 = sphi 0, %s69
      %s72 = sphi 0, %s71
      %s86 = sphi 0, %s72
      %s90 = sphi 0, %s90
      %s92 = sphi 0, %s90
      %s93 = sphi 0, %s92
      %s107 = sphi 0, %s93
      %s111 = sphi 0, %s111
      %s113 = sphi 0, %s111
      %s114 = sphi 0, %s113
      %s128 = sphi 0, %s114
      %s134 = sphi 0, %s136
      %s137 = sphi 0, %s134
      %s138 = sphi 0, %s137
      %s154 = sphi 0, %s138
    $region4: #{tpu_custom_call.1} parent=1 // loop_header_branch
      %17 = sbr.rel (%p15) target = $region8
    $region5: #{tpu_custom_call.1} parent=1 // loop_body
      %s19 = ssub.s32 %s14, 1
      %s20 = ssub.s32 %s14, 2
      %s21 = sadd.s32 %s14, 1
      %s22 = ssub.s32 %s14, %s21
      %p23 = scmp.eq.s32.totalorder %s22, 0
      %s25 = sadd.s32 %s24, 1
      %s26 = scalar_select %p23, %s24, %s25
      %p29 = pneg %p23
      %p30 = scmp.eq.s32.totalorder %s14, 1
      %p31 = por %p29, %p30
      %p32 = scmp.ne.s32.totalorder %s24, %s27
      %p33 = scmp.eq.s32.totalorder %s14, 0
      %p34 = por %p32, %p33
      %p35 = scmp.ne.s32.totalorder %s24, %s27
      %p36 = scmp.eq.s32.totalorder %s19, 1
      %p37 = por %p35, %p36
      %p38 = scmp.ne.s32.totalorder %s27, %s28
      %p39 = scmp.eq.s32.totalorder %s19, 0
      %p40 = por %p38, %p39
      %p41 = scmp.ne.s32.totalorder %s27, %s28
      %p42 = scmp.eq.s32.totalorder %s20, 1
      %p43 = por %p41, %p42
      %p45 = scmp.ne.s32.totalorder %s28, %s44
      %p46 = scmp.eq.s32.totalorder %s20, 0
      %p47 = por %p45, %p46
      %s49 = sadd.s32 %s48, 1
      %p52 = scmp.eq.s32.totalorder %s14, 1
      %p53 = scmp.ne.s32.totalorder %s48, %s50
      %p54 = scmp.eq.s32.totalorder %s14, 0
      %p55 = por %p53, %p54
      %p56 = scmp.ne.s32.totalorder %s48, %s50
      %p57 = scmp.eq.s32.totalorder %s19, 1
      %p58 = por %p56, %p57
      %p59 = scmp.ne.s32.totalorder %s50, %s51
      %p60 = scmp.eq.s32.totalorder %s19, 0
      %p61 = por %p59, %p60
      %p62 = scmp.ne.s32.totalorder %s50, %s51
      %p63 = scmp.eq.s32.totalorder %s20, 1
      %p64 = por %p62, %p63
      %p66 = scmp.ne.s32.totalorder %s51, %s65
      %p67 = scmp.eq.s32.totalorder %s20, 0
      %p68 = por %p66, %p67
      %s70 = sadd.s32 %s69, 1
      %p73 = scmp.eq.s32.totalorder %s14, 1
      %p74 = scmp.ne.s32.totalorder %s69, %s71
      %p75 = scmp.eq.s32.totalorder %s14, 0
      %p76 = por %p74, %p75
      %p77 = scmp.ne.s32.totalorder %s69, %s71
      %p78 = scmp.eq.s32.totalorder %s19, 1
      %p79 = por %p77, %p78
      %p80 = scmp.ne.s32.totalorder %s71, %s72
      %p81 = scmp.eq.s32.totalorder %s19, 0
      %p82 = por %p80, %p81
      %p83 = scmp.ne.s32.totalorder %s71, %s72
      %p84 = scmp.eq.s32.totalorder %s20, 1
      %p85 = por %p83, %p84
      %p87 = scmp.ne.s32.totalorder %s72, %s86
      %p88 = scmp.eq.s32.totalorder %s20, 0
      %p89 = por %p87, %p88
      %s91 = sadd.s32 %s90, 1
      %p94 = scmp.eq.s32.totalorder %s14, 1
      %p95 = scmp.ne.s32.totalorder %s90, %s92
      %p96 = scmp.eq.s32.totalorder %s14, 0
      %p97 = por %p95, %p96
      %p98 = scmp.ne.s32.totalorder %s90, %s92
      %p99 = scmp.eq.s32.totalorder %s19, 1
      %p100 = por %p98, %p99
      %p101 = scmp.ne.s32.totalorder %s92, %s93
      %p102 = scmp.eq.s32.totalorder %s19, 0
      %p103 = por %p101, %p102
      %p104 = scmp.ne.s32.totalorder %s92, %s93
      %p105 = scmp.eq.s32.totalorder %s20, 1
      %p106 = por %p104, %p105
      %p108 = scmp.ne.s32.totalorder %s93, %s107
      %p109 = scmp.eq.s32.totalorder %s20, 0
      %p110 = por %p108, %p109
      %s112 = sadd.s32 %s111, 1
      %p115 = scmp.eq.s32.totalorder %s14, 1
      %p116 = scmp.ne.s32.totalorder %s111, %s113
      %p117 = scmp.eq.s32.totalorder %s14, 0
      %p118 = por %p116, %p117
      %p119 = scmp.ne.s32.totalorder %s111, %s113
      %p120 = scmp.eq.s32.totalorder %s19, 1
      %p121 = por %p119, %p120
      %p122 = scmp.ne.s32.totalorder %s113, %s114
      %p123 = scmp.eq.s32.totalorder %s19, 0
      %p124 = por %p122, %p123
      %p125 = scmp.ne.s32.totalorder %s113, %s114
      %p126 = scmp.eq.s32.totalorder %s20, 1
      %p127 = por %p125, %p126
      %p129 = scmp.ne.s32.totalorder %s114, %s128
      %p130 = scmp.eq.s32.totalorder %s20, 0
      %p131 = por %p129, %p130
      %s132 = ssub.s32 %s14, %s21
      %p133 = scmp.eq.s32.totalorder %s132, 0
      %s135 = sadd.s32 %s134, 1
      %s136 = scalar_select %p133, %s134, %s135
      %p139 = pneg %p133
      %p140 = scmp.eq.s32.totalorder %s14, 1
      %p141 = por %p139, %p140
      %p142 = scmp.ne.s32.totalorder %s134, %s137
      %p143 = scmp.eq.s32.totalorder %s14, 0
      %p144 = por %p142, %p143
      %p145 = scmp.ne.s32.totalorder %s134, %s137
      %p146 = scmp.eq.s32.totalorder %s19, 1
      %p147 = por %p145, %p146
      %p148 = scmp.ne.s32.totalorder %s137, %s138
      %p149 = scmp.eq.s32.totalorder %s19, 0
      %p150 = por %p148, %p149
      %p151 = scmp.ne.s32.totalorder %s137, %s138
      %p152 = scmp.eq.s32.totalorder %s20, 1
      %p153 = por %p151, %p152
      %p155 = scmp.ne.s32.totalorder %s138, %s154
      %p156 = scmp.eq.s32.totalorder %s20, 0
      %p157 = por %p155, %p156
      %p158 = scmp.le.s32.totalorder 1, %s14
      %p159 = scmp.lt.s32.totalorder %s14, 3
      %p160 = pnand %p158, %p159
      %p161 = pneg %p160
      // Predicated region
      $region9: #{tpu_custom_call.1} parent=5 // pred_check
        _
      $region10: #{tpu_custom_call.1} parent=5 // pred_check_branch
        %163 = sbr.rel (%p160) target = $region12
      $region11: #{tpu_custom_call.1} parent=5 // pred_region
        %s164 = ssub.s32 %s14, 1
        // Predicated region
        $region13: #{tpu_custom_call.1} parent=11 // pred_check
          %p165 = pneg %p61
        $region14: #{tpu_custom_call.1} parent=11 // pred_check_branch
          %167 = sbr.rel (%p165) target = $region16
        $region15: #{tpu_custom_call.1} parent=11 // pred_region
          _
        $region16: #{tpu_custom_call.1} parent=11 // pred_fallthru
          _
        // Predicated region
        $region17: #{tpu_custom_call.1} parent=11 // pred_check
          %p168 = pneg %p82
        $region18: #{tpu_custom_call.1} parent=11 // pred_check_branch
          %170 = sbr.rel (%p168) target = $region20
        $region19: #{tpu_custom_call.1} parent=11 // pred_region
          _
        $region20: #{tpu_custom_call.1} parent=11 // pred_fallthru
          _
        // Predicated region
        $region21: #{tpu_custom_call.1} parent=11 // pred_check
          %p171 = pneg %p103
        $region22: #{tpu_custom_call.1} parent=11 // pred_check_branch
          %173 = sbr.rel (%p171) target = $region24
        $region23: #{tpu_custom_call.1} parent=11 // pred_region
          _
        $region24: #{tpu_custom_call.1} parent=11 // pred_fallthru
          _
        // Predicated region
        $region25: #{tpu_custom_call.1} parent=11 // pred_check
          %p174 = pneg %p124
        $region26: #{tpu_custom_call.1} parent=11 // pred_check_branch
          %176 = sbr.rel (%p174) target = $region28
        $region27: #{tpu_custom_call.1} parent=11 // pred_region
          _
        $region28: #{tpu_custom_call.1} parent=11 // pred_fallthru
          _
      $region12: #{tpu_custom_call.1} parent=5 // pred_fallthru
        _
      %p177 = scmp.lt.s32.totalorder %s14, 2
      // Predicated region
      $region29: #{tpu_custom_call.1} parent=5 // pred_check
        %p178 = pneg %p177
      $region30: #{tpu_custom_call.1} parent=5 // pred_check_branch
        %180 = sbr.rel (%p178) target = $region32
      $region31: #{tpu_custom_call.1} parent=5 // pred_region
        // Predicated region
        $region33: #{tpu_custom_call.1} parent=31 // pred_check
          %p181 = pneg %p34
        $region34: #{tpu_custom_call.1} parent=31 // pred_check_branch
          %183 = sbr.rel (%p181) target = $region36
        $region35: #{tpu_custom_call.1} parent=31 // pred_region
          %p184 = scmp.lt.s32.totalorder %s14, 1
          %s185 = scalar_select %p184, %s14, 1
          %s186 = smul.addr %s185, 10
          %s187 = smul.addr %s186, 4
          %s188 = scalar_lea.vmem %s0, %s187
        $region36: #{tpu_custom_call.1} parent=31 // pred_fallthru
          _
      $region32: #{tpu_custom_call.1} parent=5 // pred_fallthru
        _
      %p189 = scmp.le.s32.totalorder 1, %s14
      %p190 = scmp.lt.s32.totalorder %s14, 3
      %p191 = pnand %p189, %p190
      %p192 = pneg %p191
      // Predicated region
      $region37: #{tpu_custom_call.1} parent=5 // pred_check
        _
      $region38: #{tpu_custom_call.1} parent=5 // pred_check_branch
        %194 = sbr.rel (%p191) target = $region40
      $region39: #{tpu_custom_call.1} parent=5 // pred_region
        %s195 = ssub.s32 %s14, 1
        %p196 = scmp.lt.s32.totalorder %s19, 1
        %s197 = scalar_select %p196, %s19, 1
        %s198 = smul.addr %s197, 10
        %s199 = smul.addr %s198, 4
        %s200 = scalar_lea.vmem %s0, %s199
        %p201 = pneg %p40
        %p202 = pneg %p37
        %p203 = pneg %p61
        %p204 = pneg %p58
        %p205 = pneg %p82
        %p206 = pneg %p79
        %p207 = pneg %p103
        %p208 = pneg %p100
        %p209 = pneg %p124
        %p210 = pneg %p121
        %p211 = pneg %p150
        %p212 = pneg %p147
        %s213 = sand.u32 %s137, 1
        %s214 = scalar_lea.sflag [#allocation3], %s213
        %s215 = sand.u32 %s137, 1
        %s216 = smul.addr %s215, 72
        %s217 = scalar_lea.vmem [#allocation2], %s216
        %p218 = scmp.lt.s32.totalorder %s19, 1
        %s219 = scalar_select %p218, %s19, 1
        %s220 = smul.addr %s219, 10
        %s221 = smul.addr %s220, 4
        %s222 = scalar_lea.vmem %s0, %s221
        %v224 = vld [vmem:[%s222] sm:$0xff]
        %v225 = vld [vmem:[%s222 + $0x8] sm:$0xff]
        %v226 = vld [vmem:[%s222 + $0x10] sm:$0xff]
        %v227 = vld [vmem:[%s222 + $0x18] sm:$0xff]
        %v228 = vld [vmem:[%s222 + $0x20] sm:$0xff]
        %234 = vst [vmem:[#allocation1] ss:$2 sm:$0xff] %v224
        %s235 = scalar_lea.vmem [#allocation1], 16
        %236 = vst [vmem:[%s235] ss:$2 sm:$0xff] %v225
        %s237 = scalar_lea.vmem [#allocation1], 32
        %238 = vst [vmem:[%s237] ss:$2 sm:$0xff] %v226
        %s239 = scalar_lea.vmem [#allocation1], 48
        %240 = vst [vmem:[%s239] ss:$2 sm:$0xff] %v227
        %v241 = vld.sshfl [vmem:[#allocation1] sm:$0xff pattern:$0x75316420]
        %v242 = vld.sshfl [vmem:[#allocation1 + $0x8] sm:$0xff pattern:$0x75316420]
        %v243 = vld.sshfl [vmem:[#allocation1 + $0x10] sm:$0xff pattern:$0x75316420]
        %v244 = vld.sshfl [vmem:[#allocation1 + $0x18] sm:$0xff pattern:$0x75316420]
        %v245 = vld.sshfl [vmem:[#allocation1 + $0x20] sm:$0xff pattern:$0x75316420]
        %v246 = vld.sshfl [vmem:[#allocation1 + $0x28] sm:$0xff pattern:$0x75316420]
        %v247 = vld.sshfl [vmem:[#allocation1 + $0x30] sm:$0xff pattern:$0x75316420]
        %v248 = vld.sshfl [vmem:[#allocation1 + $0x38] sm:$0xff pattern:$0x75316420]
        %249 = vst [vmem:[#allocation1] ss:$2 sm:$0xff] %v228
        %v250 = vld.sshfl [vmem:[#allocation1] sm:$0xff pattern:$0x75316420]
        %v260 = vpack.c.bf16 %v241, %v241
        %v261 = vpack.c.bf16 %v242, %v242
        %v262 = vpack.c.bf16 %v243, %v243
        %v263 = vpack.c.bf16 %v244, %v244
        %v264 = vpack.c.bf16 %v245, %v245
        %v265 = vpack.c.bf16 %v246, %v246
        %v266 = vpack.c.bf16 %v247, %v247
        %v267 = vpack.c.bf16 %v248, %v248
        %v268 = vpack.c.bf16 %v250, %v250
        %v269 = vld [vmem:[%s1] sm:$0xff]
        %v270 = vpack.c.bf16 %v269, %v269
        %271 = vst [vmem:[#allocation1] ss:$2 sm:$0xff] %v224
        %s272 = scalar_lea.vmem [#allocation1], 16
        %273 = vst [vmem:[%s272] ss:$2 sm:$0xff] %v225
        %s274 = scalar_lea.vmem [#allocation1], 32
        %275 = vst [vmem:[%s274] ss:$2 sm:$0xff] %v226
        %s276 = scalar_lea.vmem [#allocation1], 48
        %277 = vst [vmem:[%s276] ss:$2 sm:$0xff] %v227
        %v278 = vld.sshfl [vmem:[#allocation1] sm:$0xff pattern:$0x75316420]
        %v279 = vld.sshfl [vmem:[#allocation1 + $0x8] sm:$0xff pattern:$0x75316420]
        %v280 = vld.sshfl [vmem:[#allocation1 + $0x10] sm:$0xff pattern:$0x75316420]
        %v281 = vld.sshfl [vmem:[#allocation1 + $0x18] sm:$0xff pattern:$0x75316420]
        %v282 = vld.sshfl [vmem:[#allocation1 + $0x20] sm:$0xff pattern:$0x75316420]
        %v283 = vld.sshfl [vmem:[#allocation1 + $0x28] sm:$0xff pattern:$0x75316420]
        %v284 = vld.sshfl [vmem:[#allocation1 + $0x30] sm:$0xff pattern:$0x75316420]
        %v285 = vld.sshfl [vmem:[#allocation1 + $0x38] sm:$0xff pattern:$0x75316420]
        %286 = vst [vmem:[#allocation1] ss:$2 sm:$0xff] %v228
        %v287 = vld.sshfl [vmem:[#allocation1] sm:$0xff pattern:$0x75316420]
        %v297 = vpack.c.bf16 %v278, %v278
        %v298 = vpack.c.bf16 %v279, %v279
        %v299 = vpack.c.bf16 %v280, %v280
        %v300 = vpack.c.bf16 %v281, %v281
        %v301 = vpack.c.bf16 %v282, %v282
        %v302 = vpack.c.bf16 %v283, %v283
        %v303 = vpack.c.bf16 %v284, %v284
        %v304 = vpack.c.bf16 %v285, %v285
        %v305 = vpack.c.bf16 %v287, %v287
        %s306 = scalar_lea.vmem %s1, 8
        %v307 = vld [vmem:[%s306] sm:$0xff]
        %v308 = vpack.c.bf16 %v307, %v307
        %318 = vrot.lane.b32.xlu0 %v297, 127
        %v319 = vpop.permute.xlu0 %318
        %320 = vrot.lane.b32.xlu0 %v298, 127
        %v321 = vpop.permute.xlu0 %320
        %322 = vrot.lane.b32.xlu0 %v299, 127
        %v323 = vpop.permute.xlu0 %322
        %324 = vrot.lane.b32.xlu0 %v300, 127
        %v325 = vpop.permute.xlu0 %324
        %326 = vrot.lane.b32.xlu0 %v301, 127
        %v327 = vpop.permute.xlu0 %326
        %328 = vrot.lane.b32.xlu0 %v302, 127
        %v329 = vpop.permute.xlu0 %328
        %330 = vrot.lane.b32.xlu0 %v303, 127
        %v331 = vpop.permute.xlu0 %330
        %332 = vrot.lane.b32.xlu0 %v304, 127
        %v333 = vpop.permute.xlu0 %332
        %334 = vrot.lane.b32.xlu0 %v305, 127
        %v335 = vpop.permute.xlu0 %334
        %vm336 = vcmask 1039360
        %v337 = vsel %vm336, %v319, %v321
        %v338 = vsel %vm336, %v321, %v323
        %v339 = vsel %vm336, %v323, %v325
        %v340 = vsel %vm336, %v325, %v327
        %v341 = vsel %vm336, %v327, %v329
        %v342 = vsel %vm336, %v329, %v331
        %v343 = vsel %vm336, %v331, %v333
        %v344 = vsel %vm336, %v333, %v335
        %vm345 = vcmask 31744
        %v347 = vsel %vm345, %v308, 0
        %vm349 = vcmask 1041408
        %v351 = vsel %vm349, %v337, 0
        %v354 = vsel %vm349, %v338, 0
        %v357 = vsel %vm349, %v339, 0
        %v360 = vsel %vm349, %v340, 0
        %v363 = vsel %vm349, %v341, 0
        %v366 = vsel %vm349, %v342, 0
        %v369 = vsel %vm349, %v343, 0
        %v372 = vsel %vm349, %v344, 0
        %v375 = vsel %vm349, %v335, 0
        %377 = vmatpush.bf16.msra.mxu0 0
        %378 = vmatpush.bf16.msra.mxu0 0
        %379 = vmatpush.bf16.msra.mxu0 0
        %380 = vmatpush.bf16.msra.mxu0 0
        %381 = vmatpush.bf16.msra.mxu0 0
        %382 = vmatpush.bf16.msra.mxu0 0
        %383 = vmatpush.bf16.msra.mxu0 0
        %384 = vmatpush.bf16.msra.mxu0 %v351
        %385 = vmatmul.bf16.gmra.mxu0 %v347
        %v386 = vpop.f32.mrf.mxu0
        %v387 = vadd.f32 0.0, %v386
        %v388 = vpop.f32.mrf.mxu0
        %389 = vdwg.mxu0
        %390 = vmatpush.bf16.msra.mxu0 0
        %391 = vmatpush.bf16.msra.mxu0 0
        %392 = vmatpush.bf16.msra.mxu0 0
        %393 = vmatpush.bf16.msra.mxu0 0
        %394 = vmatpush.bf16.msra.mxu0 0
        %395 = vmatpush.bf16.msra.mxu0 0
        %396 = vmatpush.bf16.msra.mxu0 0
        %397 = vmatpush.bf16.msra.mxu0 %v354
        %398 = vmatmul.bf16.gmra.mxu0 %v347
        %v399 = vpop.f32.mrf.mxu0
        %v400 = vadd.f32 0.0, %v399
        %v401 = vpop.f32.mrf.mxu0
        %402 = vdwg.mxu0
        %403 = vmatpush.bf16.msra.mxu0 0
        %404 = vmatpush.bf16.msra.mxu0 0
        %405 = vmatpush.bf16.msra.mxu0 0
        %406 = vmatpush.bf16.msra.mxu0 0
        %407 = vmatpush.bf16.msra.mxu0 0
        %408 = vmatpush.bf16.msra.mxu0 0
        %409 = vmatpush.bf16.msra.mxu0 0
        %410 = vmatpush.bf16.msra.mxu0 %v357
        %411 = vmatmul.bf16.gmra.mxu0 %v347
        %v412 = vpop.f32.mrf.mxu0
        %v413 = vadd.f32 0.0, %v412
        %v414 = vpop.f32.mrf.mxu0
        %415 = vdwg.mxu0
        %416 = vmatpush.bf16.msra.mxu0 0
        %417 = vmatpush.bf16.msra.mxu0 0
        %418 = vmatpush.bf16.msra.mxu0 0
        %419 = vmatpush.bf16.msra.mxu0 0
        %420 = vmatpush.bf16.msra.mxu0 0
        %421 = vmatpush.bf16.msra.mxu0 0
        %422 = vmatpush.bf16.msra.mxu0 0
        %423 = vmatpush.bf16.msra.mxu0 %v360
        %424 = vmatmul.bf16.gmra.mxu0 %v347
        %v425 = vpop.f32.mrf.mxu0
        %v426 = vadd.f32 0.0, %v425
        %v427 = vpop.f32.mrf.mxu0
        %428 = vdwg.mxu0
        %429 = vmatpush.bf16.msra.mxu0 0
        %430 = vmatpush.bf16.msra.mxu0 0
        %431 = vmatpush.bf16.msra.mxu0 0
        %432 = vmatpush.bf16.msra.mxu0 0
        %433 = vmatpush.bf16.msra.mxu0 0
        %434 = vmatpush.bf16.msra.mxu0 0
        %435 = vmatpush.bf16.msra.mxu0 0
        %436 = vmatpush.bf16.msra.mxu0 %v363
        %437 = vmatmul.bf16.gmra.mxu0 %v347
        %v438 = vpop.f32.mrf.mxu0
        %v439 = vadd.f32 0.0, %v438
        %v440 = vpop.f32.mrf.mxu0
        %441 = vdwg.mxu0
        %442 = vmatpush.bf16.msra.mxu0 0
        %443 = vmatpush.bf16.msra.mxu0 0
        %444 = vmatpush.bf16.msra.mxu0 0
        %445 = vmatpush.bf16.msra.mxu0 0
        %446 = vmatpush.bf16.msra.mxu0 0
        %447 = vmatpush.bf16.msra.mxu0 0
        %448 = vmatpush.bf16.msra.mxu0 0
        %449 = vmatpush.bf16.msra.mxu0 %v366
        %450 = vmatmul.bf16.gmra.mxu0 %v347
        %v451 = vpop.f32.mrf.mxu0
        %v452 = vadd.f32 0.0, %v451
        %v453 = vpop.f32.mrf.mxu0
        %454 = vdwg.mxu0
        %455 = vmatpush.bf16.msra.mxu0 0
        %456 = vmatpush.bf16.msra.mxu0 0
        %457 = vmatpush.bf16.msra.mxu0 0
        %458 = vmatpush.bf16.msra.mxu0 0
        %459 = vmatpush.bf16.msra.mxu0 0
        %460 = vmatpush.bf16.msra.mxu0 0
        %461 = vmatpush.bf16.msra.mxu0 0
        %462 = vmatpush.bf16.msra.mxu0 %v369
        %463 = vmatmul.bf16.gmra.mxu0 %v347
        %v464 = vpop.f32.mrf.mxu0
        %v465 = vadd.f32 0.0, %v464
        %v466 = vpop.f32.mrf.mxu0
        %467 = vdwg.mxu0
        %468 = vmatpush.bf16.msra.mxu0 0
        %469 = vmatpush.bf16.msra.mxu0 0
        %470 = vmatpush.bf16.msra.mxu0 0
        %471 = vmatpush.bf16.msra.mxu0 0
        %472 = vmatpush.bf16.msra.mxu0 0
        %473 = vmatpush.bf16.msra.mxu0 0
        %474 = vmatpush.bf16.msra.mxu0 0
        %475 = vmatpush.bf16.msra.mxu0 %v372
        %476 = vmatmul.bf16.gmra.mxu0 %v347
        %v477 = vpop.f32.mrf.mxu0
        %v478 = vadd.f32 0.0, %v477
        %v479 = vpop.f32.mrf.mxu0
        %480 = vdwg.mxu0
        %481 = vmatpush.bf16.msra.mxu0 0
        %482 = vmatpush.bf16.msra.mxu0 0
        %483 = vmatpush.bf16.msra.mxu0 0
        %484 = vmatpush.bf16.msra.mxu0 0
        %485 = vmatpush.bf16.msra.mxu0 0
        %486 = vmatpush.bf16.msra.mxu0 0
        %487 = vmatpush.bf16.msra.mxu0 0
        %488 = vmatpush.bf16.msra.mxu0 %v375
        %489 = vmatmul.bf16.gmra.mxu0 %v347
        %v490 = vpop.f32.mrf.mxu0
        %v491 = vadd.f32 0.0, %v490
        %v492 = vpop.f32.mrf.mxu0
        %493 = vdwg.mxu0
        %v495 = vsel %vm345, %v270, 0
        %v498 = vsel %vm349, %v260, 0
        %v501 = vsel %vm349, %v261, 0
        %v504 = vsel %vm349, %v262, 0
        %v507 = vsel %vm349, %v263, 0
        %v510 = vsel %vm349, %v264, 0
        %v513 = vsel %vm349, %v265, 0
        %v516 = vsel %vm349, %v266, 0
        %v519 = vsel %vm349, %v267, 0
        %v522 = vsel %vm349, %v268, 0
        %524 = vmatpush.bf16.msra.mxu0 0
        %525 = vmatpush.bf16.msra.mxu0 0
        %526 = vmatpush.bf16.msra.mxu0 0
        %527 = vmatpush.bf16.msra.mxu0 0
        %528 = vmatpush.bf16.msra.mxu0 0
        %529 = vmatpush.bf16.msra.mxu0 0
        %530 = vmatpush.bf16.msra.mxu0 0
        %531 = vmatpush.bf16.msra.mxu0 %v498
        %532 = vmatmul.bf16.gmra.mxu0 %v495
        %v533 = vpop.f32.mrf.mxu0
        %v534 = vadd.f32 %v387, %v533
        %v535 = vpop.f32.mrf.mxu0
        %536 = vdwg.mxu0
        %537 = vmatpush.bf16.msra.mxu0 0
        %538 = vmatpush.bf16.msra.mxu0 0
        %539 = vmatpush.bf16.msra.mxu0 0
        %540 = vmatpush.bf16.msra.mxu0 0
        %541 = vmatpush.bf16.msra.mxu0 0
        %542 = vmatpush.bf16.msra.mxu0 0
        %543 = vmatpush.bf16.msra.mxu0 0
        %544 = vmatpush.bf16.msra.mxu0 %v501
        %545 = vmatmul.bf16.gmra.mxu0 %v495
        %v546 = vpop.f32.mrf.mxu0
        %v547 = vadd.f32 %v400, %v546
        %v548 = vpop.f32.mrf.mxu0
        %549 = vdwg.mxu0
        %550 = vmatpush.bf16.msra.mxu0 0
        %551 = vmatpush.bf16.msra.mxu0 0
        %552 = vmatpush.bf16.msra.mxu0 0
        %553 = vmatpush.bf16.msra.mxu0 0
        %554 = vmatpush.bf16.msra.mxu0 0
        %555 = vmatpush.bf16.msra.mxu0 0
        %556 = vmatpush.bf16.msra.mxu0 0
        %557 = vmatpush.bf16.msra.mxu0 %v504
        %558 = vmatmul.bf16.gmra.mxu0 %v495
        %v559 = vpop.f32.mrf.mxu0
        %v560 = vadd.f32 %v413, %v559
        %v561 = vpop.f32.mrf.mxu0
        %562 = vdwg.mxu0
        %563 = vmatpush.bf16.msra.mxu0 0
        %564 = vmatpush.bf16.msra.mxu0 0
        %565 = vmatpush.bf16.msra.mxu0 0
        %566 = vmatpush.bf16.msra.mxu0 0
        %567 = vmatpush.bf16.msra.mxu0 0
        %568 = vmatpush.bf16.msra.mxu0 0
        %569 = vmatpush.bf16.msra.mxu0 0
        %570 = vmatpush.bf16.msra.mxu0 %v507
        %571 = vmatmul.bf16.gmra.mxu0 %v495
        %v572 = vpop.f32.mrf.mxu0
        %v573 = vadd.f32 %v426, %v572
        %v574 = vpop.f32.mrf.mxu0
        %575 = vdwg.mxu0
        %576 = vmatpush.bf16.msra.mxu0 0
        %577 = vmatpush.bf16.msra.mxu0 0
        %578 = vmatpush.bf16.msra.mxu0 0
        %579 = vmatpush.bf16.msra.mxu0 0
        %580 = vmatpush.bf16.msra.mxu0 0
        %581 = vmatpush.bf16.msra.mxu0 0
        %582 = vmatpush.bf16.msra.mxu0 0
        %583 = vmatpush.bf16.msra.mxu0 %v510
        %584 = vmatmul.bf16.gmra.mxu0 %v495
        %v585 = vpop.f32.mrf.mxu0
        %v586 = vadd.f32 %v439, %v585
        %v587 = vpop.f32.mrf.mxu0
        %588 = vdwg.mxu0
        %589 = vmatpush.bf16.msra.mxu0 0
        %590 = vmatpush.bf16.msra.mxu0 0
        %591 = vmatpush.bf16.msra.mxu0 0
        %592 = vmatpush.bf16.msra.mxu0 0
        %593 = vmatpush.bf16.msra.mxu0 0
        %594 = vmatpush.bf16.msra.mxu0 0
        %595 = vmatpush.bf16.msra.mxu0 0
        %596 = vmatpush.bf16.msra.mxu0 %v513
        %597 = vmatmul.bf16.gmra.mxu0 %v495
        %v598 = vpop.f32.mrf.mxu0
        %v599 = vadd.f32 %v452, %v598
        %v600 = vpop.f32.mrf.mxu0
        %601 = vdwg.mxu0
        %602 = vmatpush.bf16.msra.mxu0 0
        %603 = vmatpush.bf16.msra.mxu0 0
        %604 = vmatpush.bf16.msra.mxu0 0
        %605 = vmatpush.bf16.msra.mxu0 0
        %606 = vmatpush.bf16.msra.mxu0 0
        %607 = vmatpush.bf16.msra.mxu0 0
        %608 = vmatpush.bf16.msra.mxu0 0
        %609 = vmatpush.bf16.msra.mxu0 %v516
        %610 = vmatmul.bf16.gmra.mxu0 %v495
        %v611 = vpop.f32.mrf.mxu0
        %v612 = vadd.f32 %v465, %v611
        %v613 = vpop.f32.mrf.mxu0
        %614 = vdwg.mxu0
        %615 = vmatpush.bf16.msra.mxu0 0
        %616 = vmatpush.bf16.msra.mxu0 0
        %617 = vmatpush.bf16.msra.mxu0 0
        %618 = vmatpush.bf16.msra.mxu0 0
        %619 = vmatpush.bf16.msra.mxu0 0
        %620 = vmatpush.bf16.msra.mxu0 0
        %621 = vmatpush.bf16.msra.mxu0 0
        %622 = vmatpush.bf16.msra.mxu0 %v519
        %623 = vmatmul.bf16.gmra.mxu0 %v495
        %v624 = vpop.f32.mrf.mxu0
        %v625 = vadd.f32 %v478, %v624
        %v626 = vpop.f32.mrf.mxu0
        %627 = vdwg.mxu0
        %628 = vmatpush.bf16.msra.mxu0 0
        %629 = vmatpush.bf16.msra.mxu0 0
        %630 = vmatpush.bf16.msra.mxu0 0
        %631 = vmatpush.bf16.msra.mxu0 0
        %632 = vmatpush.bf16.msra.mxu0 0
        %633 = vmatpush.bf16.msra.mxu0 0
        %634 = vmatpush.bf16.msra.mxu0 0
        %635 = vmatpush.bf16.msra.mxu0 %v522
        %636 = vmatmul.bf16.gmra.mxu0 %v495
        %v637 = vpop.f32.mrf.mxu0
        %v638 = vadd.f32 %v491, %v637
        %v639 = vpop.f32.mrf.mxu0
        %640 = vdwg.mxu0
        %641 = vst [vmem:[#allocation1] ss:$2 sm:$0xff] %v224
        %s642 = scalar_lea.vmem [#allocation1], 16
        %643 = vst [vmem:[%s642] ss:$2 sm:$0xff] %v225
        %s644 = scalar_lea.vmem [#allocation1], 32
        %645 = vst [vmem:[%s644] ss:$2 sm:$0xff] %v226
        %s646 = scalar_lea.vmem [#allocation1], 48
        %647 = vst [vmem:[%s646] ss:$2 sm:$0xff] %v227
        %v648 = vld.sshfl [vmem:[#allocation1] sm:$0xff pattern:$0x75316420]
        %v649 = vld.sshfl [vmem:[#allocation1 + $0x8] sm:$0xff pattern:$0x75316420]
        %v650 = vld.sshfl [vmem:[#allocation1 + $0x10] sm:$0xff pattern:$0x75316420]
        %v651 = vld.sshfl [vmem:[#allocation1 + $0x18] sm:$0xff pattern:$0x75316420]
        %v652 = vld.sshfl [vmem:[#allocation1 + $0x20] sm:$0xff pattern:$0x75316420]
        %v653 = vld.sshfl [vmem:[#allocation1 + $0x28] sm:$0xff pattern:$0x75316420]
        %v654 = vld.sshfl [vmem:[#allocation1 + $0x30] sm:$0xff pattern:$0x75316420]
        %v655 = vld.sshfl [vmem:[#allocation1 + $0x38] sm:$0xff pattern:$0x75316420]
        %656 = vst [vmem:[#allocation1] ss:$2 sm:$0xff] %v228
        %v657 = vld.sshfl [vmem:[#allocation1] sm:$0xff pattern:$0x75316420]
        %v667 = vpack.c.bf16 %v648, %v648
        %v668 = vpack.c.bf16 %v649, %v649
        %v669 = vpack.c.bf16 %v650, %v650
        %v670 = vpack.c.bf16 %v651, %v651
        %v671 = vpack.c.bf16 %v652, %v652
        %v672 = vpack.c.bf16 %v653, %v653
        %v673 = vpack.c.bf16 %v654, %v654
        %v674 = vpack.c.bf16 %v655, %v655
        %v675 = vpack.c.bf16 %v657, %v657
        %s676 = scalar_lea.vmem %s1, 16
        %v677 = vld [vmem:[%s676] sm:$0xff]
        %v678 = vpack.c.bf16 %v677, %v677
        %688 = vrot.lane.b32.xlu0 %v667, 126
        %v689 = vpop.permute.xlu0 %688
        %690 = vrot.lane.b32.xlu0 %v668, 126
        %v691 = vpop.permute.xlu0 %690
        %692 = vrot.lane.b32.xlu0 %v669, 126
        %v693 = vpop.permute.xlu0 %692
        %694 = vrot.lane.b32.xlu0 %v670, 126
        %v695 = vpop.permute.xlu0 %694
        %696 = vrot.lane.b32.xlu0 %v671, 126
        %v697 = vpop.permute.xlu0 %696
        %698 = vrot.lane.b32.xlu0 %v672, 126
        %v699 = vpop.permute.xlu0 %698
        %700 = vrot.lane.b32.xlu0 %v673, 126
        %v701 = vpop.permute.xlu0 %700
        %702 = vrot.lane.b32.xlu0 %v674, 126
        %v703 = vpop.permute.xlu0 %702
        %704 = vrot.lane.b32.xlu0 %v675, 126
        %v705 = vpop.permute.xlu0 %704
        %vm706 = vcmask 1031168
        %v707 = vsel %vm706, %v689, %v691
        %v708 = vsel %vm706, %v691, %v693
        %v709 = vsel %vm706, %v693, %v695
        %v710 = vsel %vm706, %v695, %v697
        %v711 = vsel %vm706, %v697, %v699
        %v712 = vsel %vm706, %v699, %v701
        %v713 = vsel %vm706, %v701, %v703
        %v714 = vsel %vm706, %v703, %v705
        %v716 = vsel %vm345, %v678, 0
        %v719 = vsel %vm349, %v707, 0
        %v722 = vsel %vm349, %v708, 0
        %v725 = vsel %vm349, %v709, 0
        %v728 = vsel %vm349, %v710, 0
        %v731 = vsel %vm349, %v711, 0
        %v734 = vsel %vm349, %v712, 0
        %v737 = vsel %vm349, %v713, 0
        %v740 = vsel %vm349, %v714, 0
        %v743 = vsel %vm349, %v705, 0
        %745 = vmatpush.bf16.msra.mxu0 0
        %746 = vmatpush.bf16.msra.mxu0 0
        %747 = vmatpush.bf16.msra.mxu0 0
        %748 = vmatpush.bf16.msra.mxu0 0
        %749 = vmatpush.bf16.msra.mxu0 0
        %750 = vmatpush.bf16.msra.mxu0 0
        %751 = vmatpush.bf16.msra.mxu0 0
        %752 = vmatpush.bf16.msra.mxu0 %v719
        %753 = vmatmul.bf16.gmra.mxu0 %v716
        %v754 = vpop.f32.mrf.mxu0
        %v755 = vadd.f32 0.0, %v754
        %v756 = vpop.f32.mrf.mxu0
        %757 = vdwg.mxu0
        %758 = vmatpush.bf16.msra.mxu0 0
        %759 = vmatpush.bf16.msra.mxu0 0
        %760 = vmatpush.bf16.msra.mxu0 0
        %761 = vmatpush.bf16.msra.mxu0 0
        %762 = vmatpush.bf16.msra.mxu0 0
        %763 = vmatpush.bf16.msra.mxu0 0
        %764 = vmatpush.bf16.msra.mxu0 0
        %765 = vmatpush.bf16.msra.mxu0 %v722
        %766 = vmatmul.bf16.gmra.mxu0 %v716
        %v767 = vpop.f32.mrf.mxu0
        %v768 = vadd.f32 0.0, %v767
        %v769 = vpop.f32.mrf.mxu0
        %770 = vdwg.mxu0
        %771 = vmatpush.bf16.msra.mxu0 0
        %772 = vmatpush.bf16.msra.mxu0 0
        %773 = vmatpush.bf16.msra.mxu0 0
        %774 = vmatpush.bf16.msra.mxu0 0
        %775 = vmatpush.bf16.msra.mxu0 0
        %776 = vmatpush.bf16.msra.mxu0 0
        %777 = vmatpush.bf16.msra.mxu0 0
        %778 = vmatpush.bf16.msra.mxu0 %v725
        %779 = vmatmul.bf16.gmra.mxu0 %v716
        %v780 = vpop.f32.mrf.mxu0
        %v781 = vadd.f32 0.0, %v780
        %v782 = vpop.f32.mrf.mxu0
        %783 = vdwg.mxu0
        %784 = vmatpush.bf16.msra.mxu0 0
        %785 = vmatpush.bf16.msra.mxu0 0
        %786 = vmatpush.bf16.msra.mxu0 0
        %787 = vmatpush.bf16.msra.mxu0 0
        %788 = vmatpush.bf16.msra.mxu0 0
        %789 = vmatpush.bf16.msra.mxu0 0
        %790 = vmatpush.bf16.msra.mxu0 0
        %791 = vmatpush.bf16.msra.mxu0 %v728
        %792 = vmatmul.bf16.gmra.mxu0 %v716
        %v793 = vpop.f32.mrf.mxu0
        %v794 = vadd.f32 0.0, %v793
        %v795 = vpop.f32.mrf.mxu0
        %796 = vdwg.mxu0
        %797 = vmatpush.bf16.msra.mxu0 0
        %798 = vmatpush.bf16.msra.mxu0 0
        %799 = vmatpush.bf16.msra.mxu0 0
        %800 = vmatpush.bf16.msra.mxu0 0
        %801 = vmatpush.bf16.msra.mxu0 0
        %802 = vmatpush.bf16.msra.mxu0 0
        %803 = vmatpush.bf16.msra.mxu0 0
        %804 = vmatpush.bf16.msra.mxu0 %v731
        %805 = vmatmul.bf16.gmra.mxu0 %v716
        %v806 = vpop.f32.mrf.mxu0
        %v807 = vadd.f32 0.0, %v806
        %v808 = vpop.f32.mrf.mxu0
        %809 = vdwg.mxu0
        %810 = vmatpush.bf16.msra.mxu0 0
        %811 = vmatpush.bf16.msra.mxu0 0
        %812 = vmatpush.bf16.msra.mxu0 0
        %813 = vmatpush.bf16.msra.mxu0 0
        %814 = vmatpush.bf16.msra.mxu0 0
        %815 = vmatpush.bf16.msra.mxu0 0
        %816 = vmatpush.bf16.msra.mxu0 0
        %817 = vmatpush.bf16.msra.mxu0 %v734
        %818 = vmatmul.bf16.gmra.mxu0 %v716
        %v819 = vpop.f32.mrf.mxu0
        %v820 = vadd.f32 0.0, %v819
        %v821 = vpop.f32.mrf.mxu0
        %822 = vdwg.mxu0
        %823 = vmatpush.bf16.msra.mxu0 0
        %824 = vmatpush.bf16.msra.mxu0 0
        %825 = vmatpush.bf16.msra.mxu0 0
        %826 = vmatpush.bf16.msra.mxu0 0
        %827 = vmatpush.bf16.msra.mxu0 0
        %828 = vmatpush.bf16.msra.mxu0 0
        %829 = vmatpush.bf16.msra.mxu0 0
        %830 = vmatpush.bf16.msra.mxu0 %v737
        %831 = vmatmul.bf16.gmra.mxu0 %v716
        %v832 = vpop.f32.mrf.mxu0
        %v833 = vadd.f32 0.0, %v832
        %v834 = vpop.f32.mrf.mxu0
        %835 = vdwg.mxu0
        %836 = vmatpush.bf16.msra.mxu0 0
        %837 = vmatpush.bf16.msra.mxu0 0
        %838 = vmatpush.bf16.msra.mxu0 0
        %839 = vmatpush.bf16.msra.mxu0 0
        %840 = vmatpush.bf16.msra.mxu0 0
        %841 = vmatpush.bf16.msra.mxu0 0
        %842 = vmatpush.bf16.msra.mxu0 0
        %843 = vmatpush.bf16.msra.mxu0 %v740
        %844 = vmatmul.bf16.gmra.mxu0 %v716
        %v845 = vpop.f32.mrf.mxu0
        %v846 = vadd.f32 0.0, %v845
        %v847 = vpop.f32.mrf.mxu0
        %848 = vdwg.mxu0
        %849 = vmatpush.bf16.msra.mxu0 0
        %850 = vmatpush.bf16.msra.mxu0 0
        %851 = vmatpush.bf16.msra.mxu0 0
        %852 = vmatpush.bf16.msra.mxu0 0
        %853 = vmatpush.bf16.msra.mxu0 0
        %854 = vmatpush.bf16.msra.mxu0 0
        %855 = vmatpush.bf16.msra.mxu0 0
        %856 = vmatpush.bf16.msra.mxu0 %v743
        %857 = vmatmul.bf16.gmra.mxu0 %v716
        %v858 = vpop.f32.mrf.mxu0
        %v859 = vadd.f32 0.0, %v858
        %v860 = vpop.f32.mrf.mxu0
        %861 = vdwg.mxu0
        %v862 = vadd.f32 %v534, %v755
        %v863 = vadd.f32 %v547, %v768
        %v864 = vadd.f32 %v560, %v781
        %v865 = vadd.f32 %v573, %v794
        %v866 = vadd.f32 %v586, %v807
        %v867 = vadd.f32 %v599, %v820
        %v868 = vadd.f32 %v612, %v833
        %v869 = vadd.f32 %v625, %v846
        %v870 = vadd.f32 %v638, %v859
        %871 = vst [vmem:[#allocation1] ss:$2 sm:$0xff] %v224
        %s872 = scalar_lea.vmem [#allocation1], 16
        %873 = vst [vmem:[%s872] ss:$2 sm:$0xff] %v225
        %s874 = scalar_lea.vmem [#allocation1], 32
        %875 = vst [vmem:[%s874] ss:$2 sm:$0xff] %v226
        %s876 = scalar_lea.vmem [#allocation1], 48
        %877 = vst [vmem:[%s876] ss:$2 sm:$0xff] %v227
        %v878 = vld.sshfl [vmem:[#allocation1] sm:$0xff pattern:$0x75316420]
        %v879 = vld.sshfl [vmem:[#allocation1 + $0x8] sm:$0xff pattern:$0x75316420]
        %v880 = vld.sshfl [vmem:[#allocation1 + $0x10] sm:$0xff pattern:$0x75316420]
        %v881 = vld.sshfl [vmem:[#allocation1 + $0x18] sm:$0xff pattern:$0x75316420]
        %v882 = vld.sshfl [vmem:[#allocation1 + $0x20] sm:$0xff pattern:$0x75316420]
        %v883 = vld.sshfl [vmem:[#allocation1 + $0x28] sm:$0xff pattern:$0x75316420]
        %v884 = vld.sshfl [vmem:[#allocation1 + $0x30] sm:$0xff pattern:$0x75316420]
        %v885 = vld.sshfl [vmem:[#allocation1 + $0x38] sm:$0xff pattern:$0x75316420]
        %886 = vst [vmem:[#allocation1] ss:$2 sm:$0xff] %v228
        %v887 = vld.sshfl [vmem:[#allocation1] sm:$0xff pattern:$0x75316420]
        %v897 = vpack.c.bf16 %v878, %v878
        %v898 = vpack.c.bf16 %v879, %v879
        %v899 = vpack.c.bf16 %v880, %v880
        %v900 = vpack.c.bf16 %v881, %v881
        %v901 = vpack.c.bf16 %v882, %v882
        %v902 = vpack.c.bf16 %v883, %v883
        %v903 = vpack.c.bf16 %v884, %v884
        %v904 = vpack.c.bf16 %v885, %v885
        %v905 = vpack.c.bf16 %v887, %v887
        %s906 = scalar_lea.vmem %s1, 24
        %v907 = vld [vmem:[%s906] sm:$0xff]
        %v908 = vpack.c.bf16 %v907, %v907
        %918 = vrot.lane.b32.xlu0 %v897, 94
        %v919 = vpop.permute.xlu0 %918
        %920 = vrot.lane.b32.xlu0 %v898, 94
        %v921 = vpop.permute.xlu0 %920
        %922 = vrot.lane.b32.xlu0 %v899, 94
        %v923 = vpop.permute.xlu0 %922
        %924 = vrot.lane.b32.xlu0 %v900, 94
        %v925 = vpop.permute.xlu0 %924
        %926 = vrot.lane.b32.xlu0 %v901, 94
        %v927 = vpop.permute.xlu0 %926
        %928 = vrot.lane.b32.xlu0 %v902, 94
        %v929 = vpop.permute.xlu0 %928
        %930 = vrot.lane.b32.xlu0 %v903, 94
        %v931 = vpop.permute.xlu0 %930
        %932 = vrot.lane.b32.xlu0 %v904, 94
        %v933 = vpop.permute.xlu0 %932
        %934 = vrot.lane.b32.xlu0 %v905, 94
        %v935 = vpop.permute.xlu0 %934
        %vm936 = vcmask 769024
        %v937 = vsel %vm936, %v919, %v921
        %v938 = vsel %vm936, %v921, %v923
        %v939 = vsel %vm936, %v923, %v925
        %v940 = vsel %vm936, %v925, %v927
        %v941 = vsel %vm936, %v927, %v929
        %v942 = vsel %vm936, %v929, %v931
        %v943 = vsel %vm936, %v931, %v933
        %v944 = vsel %vm936, %v933, %v935
        %v946 = vsel %vm345, %v908, 0
        %v949 = vsel %vm349, %v937, 0
        %v952 = vsel %vm349, %v938, 0
        %v955 = vsel %vm349, %v939, 0
        %v958 = vsel %vm349, %v940, 0
        %v961 = vsel %vm349, %v941, 0
        %v964 = vsel %vm349, %v942, 0
        %v967 = vsel %vm349, %v943, 0
        %v970 = vsel %vm349, %v944, 0
        %v973 = vsel %vm349, %v935, 0
        %975 = vmatpush.bf16.msra.mxu0 0
        %976 = vmatpush.bf16.msra.mxu0 0
        %977 = vmatpush.bf16.msra.mxu0 0
        %978 = vmatpush.bf16.msra.mxu0 0
        %979 = vmatpush.bf16.msra.mxu0 0
        %980 = vmatpush.bf16.msra.mxu0 0
        %981 = vmatpush.bf16.msra.mxu0 0
        %982 = vmatpush.bf16.msra.mxu0 %v949
        %983 = vmatmul.bf16.gmra.mxu0 %v946
        %v984 = vpop.f32.mrf.mxu0
        %v985 = vadd.f32 0.0, %v984
        %v986 = vpop.f32.mrf.mxu0
        %987 = vdwg.mxu0
        %988 = vmatpush.bf16.msra.mxu0 0
        %989 = vmatpush.bf16.msra.mxu0 0
        %990 = vmatpush.bf16.msra.mxu0 0
        %991 = vmatpush.bf16.msra.mxu0 0
        %992 = vmatpush.bf16.msra.mxu0 0
        %993 = vmatpush.bf16.msra.mxu0 0
        %994 = vmatpush.bf16.msra.mxu0 0
        %995 = vmatpush.bf16.msra.mxu0 %v952
        %996 = vmatmul.bf16.gmra.mxu0 %v946
        %v997 = vpop.f32.mrf.mxu0
        %v998 = vadd.f32 0.0, %v997
        %v999 = vpop.f32.mrf.mxu0
        %1000 = vdwg.mxu0
        %1001 = vmatpush.bf16.msra.mxu0 0
        %1002 = vmatpush.bf16.msra.mxu0 0
        %1003 = vmatpush.bf16.msra.mxu0 0
        %1004 = vmatpush.bf16.msra.mxu0 0
        %1005 = vmatpush.bf16.msra.mxu0 0
        %1006 = vmatpush.bf16.msra.mxu0 0
        %1007 = vmatpush.bf16.msra.mxu0 0
        %1008 = vmatpush.bf16.msra.mxu0 %v955
        %1009 = vmatmul.bf16.gmra.mxu0 %v946
        %v1010 = vpop.f32.mrf.mxu0
        %v1011 = vadd.f32 0.0, %v1010
        %v1012 = vpop.f32.mrf.mxu0
        %1013 = vdwg.mxu0
        %1014 = vmatpush.bf16.msra.mxu0 0
        %1015 = vmatpush.bf16.msra.mxu0 0
        %1016 = vmatpush.bf16.msra.mxu0 0
        %1017 = vmatpush.bf16.msra.mxu0 0
        %1018 = vmatpush.bf16.msra.mxu0 0
        %1019 = vmatpush.bf16.msra.mxu0 0
        %1020 = vmatpush.bf16.msra.mxu0 0
        %1021 = vmatpush.bf16.msra.mxu0 %v958
        %1022 = vmatmul.bf16.gmra.mxu0 %v946
        %v1023 = vpop.f32.mrf.mxu0
        %v1024 = vadd.f32 0.0, %v1023
        %v1025 = vpop.f32.mrf.mxu0
        %1026 = vdwg.mxu0
        %1027 = vmatpush.bf16.msra.mxu0 0
        %1028 = vmatpush.bf16.msra.mxu0 0
        %1029 = vmatpush.bf16.msra.mxu0 0
        %1030 = vmatpush.bf16.msra.mxu0 0
        %1031 = vmatpush.bf16.msra.mxu0 0
        %1032 = vmatpush.bf16.msra.mxu0 0
        %1033 = vmatpush.bf16.msra.mxu0 0
        %1034 = vmatpush.bf16.msra.mxu0 %v961
        %1035 = vmatmul.bf16.gmra.mxu0 %v946
        %v1036 = vpop.f32.mrf.mxu0
        %v1037 = vadd.f32 0.0, %v1036
        %v1038 = vpop.f32.mrf.mxu0
        %1039 = vdwg.mxu0
        %1040 = vmatpush.bf16.msra.mxu0 0
        %1041 = vmatpush.bf16.msra.mxu0 0
        %1042 = vmatpush.bf16.msra.mxu0 0
        %1043 = vmatpush.bf16.msra.mxu0 0
        %1044 = vmatpush.bf16.msra.mxu0 0
        %1045 = vmatpush.bf16.msra.mxu0 0
        %1046 = vmatpush.bf16.msra.mxu0 0
        %1047 = vmatpush.bf16.msra.mxu0 %v964
        %1048 = vmatmul.bf16.gmra.mxu0 %v946
        %v1049 = vpop.f32.mrf.mxu0
        %v1050 = vadd.f32 0.0, %v1049
        %v1051 = vpop.f32.mrf.mxu0
        %1052 = vdwg.mxu0
        %1053 = vmatpush.bf16.msra.mxu0 0
        %1054 = vmatpush.bf16.msra.mxu0 0
        %1055 = vmatpush.bf16.msra.mxu0 0
        %1056 = vmatpush.bf16.msra.mxu0 0
        %1057 = vmatpush.bf16.msra.mxu0 0
        %1058 = vmatpush.bf16.msra.mxu0 0
        %1059 = vmatpush.bf16.msra.mxu0 0
        %1060 = vmatpush.bf16.msra.mxu0 %v967
        %1061 = vmatmul.bf16.gmra.mxu0 %v946
        %v1062 = vpop.f32.mrf.mxu0
        %v1063 = vadd.f32 0.0, %v1062
        %v1064 = vpop.f32.mrf.mxu0
        %1065 = vdwg.mxu0
        %1066 = vmatpush.bf16.msra.mxu0 0
        %1067 = vmatpush.bf16.msra.mxu0 0
        %1068 = vmatpush.bf16.msra.mxu0 0
        %1069 = vmatpush.bf16.msra.mxu0 0
        %1070 = vmatpush.bf16.msra.mxu0 0
        %1071 = vmatpush.bf16.msra.mxu0 0
        %1072 = vmatpush.bf16.msra.mxu0 0
        %1073 = vmatpush.bf16.msra.mxu0 %v970
        %1074 = vmatmul.bf16.gmra.mxu0 %v946
        %v1075 = vpop.f32.mrf.mxu0
        %v1076 = vadd.f32 0.0, %v1075
        %v1077 = vpop.f32.mrf.mxu0
        %1078 = vdwg.mxu0
        %1079 = vmatpush.bf16.msra.mxu0 0
        %1080 = vmatpush.bf16.msra.mxu0 0
        %1081 = vmatpush.bf16.msra.mxu0 0
        %1082 = vmatpush.bf16.msra.mxu0 0
        %1083 = vmatpush.bf16.msra.mxu0 0
        %1084 = vmatpush.bf16.msra.mxu0 0
        %1085 = vmatpush.bf16.msra.mxu0 0
        %1086 = vmatpush.bf16.msra.mxu0 %v973
        %1087 = vmatmul.bf16.gmra.mxu0 %v946
        %v1088 = vpop.f32.mrf.mxu0
        %v1089 = vadd.f32 0.0, %v1088
        %v1090 = vpop.f32.mrf.mxu0
        %1091 = vdwg.mxu0
        %v1092 = vadd.f32 %v862, %v985
        %v1093 = vadd.f32 %v863, %v998
        %v1094 = vadd.f32 %v864, %v1011
        %v1095 = vadd.f32 %v865, %v1024
        %v1096 = vadd.f32 %v866, %v1037
        %v1097 = vadd.f32 %v867, %v1050
        %v1098 = vadd.f32 %v868, %v1063
        %v1099 = vadd.f32 %v869, %v1076
        %v1100 = vadd.f32 %v870, %v1089
        %1101 = vst [vmem:[#allocation1] ss:$2 sm:$0xff] %v224
        %s1102 = scalar_lea.vmem [#allocation1], 16
        %1103 = vst [vmem:[%s1102] ss:$2 sm:$0xff] %v225
        %s1104 = scalar_lea.vmem [#allocation1], 32
        %1105 = vst [vmem:[%s1104] ss:$2 sm:$0xff] %v226
        %s1106 = scalar_lea.vmem [#allocation1], 48
        %1107 = vst [vmem:[%s1106] ss:$2 sm:$0xff] %v227
        %v1108 = vld.sshfl [vmem:[#allocation1] sm:$0xff pattern:$0x75316420]
        %v1109 = vld.sshfl [vmem:[#allocation1 + $0x8] sm:$0xff pattern:$0x75316420]
        %v1110 = vld.sshfl [vmem:[#allocation1 + $0x10] sm:$0xff pattern:$0x75316420]
        %v1111 = vld.sshfl [vmem:[#allocation1 + $0x18] sm:$0xff pattern:$0x75316420]
        %v1112 = vld.sshfl [vmem:[#allocation1 + $0x20] sm:$0xff pattern:$0x75316420]
        %v1113 = vld.sshfl [vmem:[#allocation1 + $0x28] sm:$0xff pattern:$0x75316420]
        %v1114 = vld.sshfl [vmem:[#allocation1 + $0x30] sm:$0xff pattern:$0x75316420]
        %v1115 = vld.sshfl [vmem:[#allocation1 + $0x38] sm:$0xff pattern:$0x75316420]
        %1116 = vst [vmem:[#allocation1] ss:$2 sm:$0xff] %v228
        %v1117 = vld.sshfl [vmem:[#allocation1] sm:$0xff pattern:$0x75316420]
        %v1127 = vpack.c.bf16 %v1108, %v1108
        %v1128 = vpack.c.bf16 %v1109, %v1109
        %v1129 = vpack.c.bf16 %v1110, %v1110
        %v1130 = vpack.c.bf16 %v1111, %v1111
        %v1131 = vpack.c.bf16 %v1112, %v1112
        %v1132 = vpack.c.bf16 %v1113, %v1113
        %v1133 = vpack.c.bf16 %v1114, %v1114
        %v1134 = vpack.c.bf16 %v1115, %v1115
        %v1135 = vpack.c.bf16 %v1117, %v1117
        %s1136 = scalar_lea.vmem %s1, 32
        %v1137 = vld [vmem:[%s1136] sm:$0xff]
        %v1138 = vpack.c.bf16 %v1137, %v1137
        %1148 = vrot.lane.b32.xlu0 %v1127, 93
        %v1149 = vpop.permute.xlu0 %1148
        %1150 = vrot.lane.b32.xlu0 %v1128, 93
        %v1151 = vpop.permute.xlu0 %1150
        %1152 = vrot.lane.b32.xlu0 %v1129, 93
        %v1153 = vpop.permute.xlu0 %1152
        %1154 = vrot.lane.b32.xlu0 %v1130, 93
        %v1155 = vpop.permute.xlu0 %1154
        %1156 = vrot.lane.b32.xlu0 %v1131, 93
        %v1157 = vpop.permute.xlu0 %1156
        %1158 = vrot.lane.b32.xlu0 %v1132, 93
        %v1159 = vpop.permute.xlu0 %1158
        %1160 = vrot.lane.b32.xlu0 %v1133, 93
        %v1161 = vpop.permute.xlu0 %1160
        %1162 = vrot.lane.b32.xlu0 %v1134, 93
        %v1163 = vpop.permute.xlu0 %1162
        %1164 = vrot.lane.b32.xlu0 %v1135, 93
        %v1165 = vpop.permute.xlu0 %1164
        %vm1166 = vcmask 760832
        %v1167 = vsel %vm1166, %v1149, %v1151
        %v1168 = vsel %vm1166, %v1151, %v1153
        %v1169 = vsel %vm1166, %v1153, %v1155
        %v1170 = vsel %vm1166, %v1155, %v1157
        %v1171 = vsel %vm1166, %v1157, %v1159
        %v1172 = vsel %vm1166, %v1159, %v1161
        %v1173 = vsel %vm1166, %v1161, %v1163
        %v1174 = vsel %vm1166, %v1163, %v1165
        %v1176 = vsel %vm345, %v1138, 0
        %v1179 = vsel %vm349, %v1167, 0
        %v1182 = vsel %vm349, %v1168, 0
        %v1185 = vsel %vm349, %v1169, 0
        %v1188 = vsel %vm349, %v1170, 0
        %v1191 = vsel %vm349, %v1171, 0
        %v1194 = vsel %vm349, %v1172, 0
        %v1197 = vsel %vm349, %v1173, 0
        %v1200 = vsel %vm349, %v1174, 0
        %v1203 = vsel %vm349, %v1165, 0
        %1205 = vmatpush.bf16.msra.mxu0 0
        %1206 = vmatpush.bf16.msra.mxu0 0
        %1207 = vmatpush.bf16.msra.mxu0 0
        %1208 = vmatpush.bf16.msra.mxu0 0
        %1209 = vmatpush.bf16.msra.mxu0 0
        %1210 = vmatpush.bf16.msra.mxu0 0
        %1211 = vmatpush.bf16.msra.mxu0 0
        %1212 = vmatpush.bf16.msra.mxu0 %v1179
        %1213 = vmatmul.bf16.gmra.mxu0 %v1176
        %v1214 = vpop.f32.mrf.mxu0
        %v1215 = vadd.f32 0.0, %v1214
        %v1216 = vpop.f32.mrf.mxu0
        %1217 = vdwg.mxu0
        %1218 = vmatpush.bf16.msra.mxu0 0
        %1219 = vmatpush.bf16.msra.mxu0 0
        %1220 = vmatpush.bf16.msra.mxu0 0
        %1221 = vmatpush.bf16.msra.mxu0 0
        %1222 = vmatpush.bf16.msra.mxu0 0
        %1223 = vmatpush.bf16.msra.mxu0 0
        %1224 = vmatpush.bf16.msra.mxu0 0
        %1225 = vmatpush.bf16.msra.mxu0 %v1182
        %1226 = vmatmul.bf16.gmra.mxu0 %v1176
        %v1227 = vpop.f32.mrf.mxu0
        %v1228 = vadd.f32 0.0, %v1227
        %v1229 = vpop.f32.mrf.mxu0
        %1230 = vdwg.mxu0
        %1231 = vmatpush.bf16.msra.mxu0 0
        %1232 = vmatpush.bf16.msra.mxu0 0
        %1233 = vmatpush.bf16.msra.mxu0 0
        %1234 = vmatpush.bf16.msra.mxu0 0
        %1235 = vmatpush.bf16.msra.mxu0 0
        %1236 = vmatpush.bf16.msra.mxu0 0
        %1237 = vmatpush.bf16.msra.mxu0 0
        %1238 = vmatpush.bf16.msra.mxu0 %v1185
        %1239 = vmatmul.bf16.gmra.mxu0 %v1176
        %v1240 = vpop.f32.mrf.mxu0
        %v1241 = vadd.f32 0.0, %v1240
        %v1242 = vpop.f32.mrf.mxu0
        %1243 = vdwg.mxu0
        %1244 = vmatpush.bf16.msra.mxu0 0
        %1245 = vmatpush.bf16.msra.mxu0 0
        %1246 = vmatpush.bf16.msra.mxu0 0
        %1247 = vmatpush.bf16.msra.mxu0 0
        %1248 = vmatpush.bf16.msra.mxu0 0
        %1249 = vmatpush.bf16.msra.mxu0 0
        %1250 = vmatpush.bf16.msra.mxu0 0
        %1251 = vmatpush.bf16.msra.mxu0 %v1188
        %1252 = vmatmul.bf16.gmra.mxu0 %v1176
        %v1253 = vpop.f32.mrf.mxu0
        %v1254 = vadd.f32 0.0, %v1253
        %v1255 = vpop.f32.mrf.mxu0
        %1256 = vdwg.mxu0
        %1257 = vmatpush.bf16.msra.mxu0 0
        %1258 = vmatpush.bf16.msra.mxu0 0
        %1259 = vmatpush.bf16.msra.mxu0 0
        %1260 = vmatpush.bf16.msra.mxu0 0
        %1261 = vmatpush.bf16.msra.mxu0 0
        %1262 = vmatpush.bf16.msra.mxu0 0
        %1263 = vmatpush.bf16.msra.mxu0 0
        %1264 = vmatpush.bf16.msra.mxu0 %v1191
        %1265 = vmatmul.bf16.gmra.mxu0 %v1176
        %v1266 = vpop.f32.mrf.mxu0
        %v1267 = vadd.f32 0.0, %v1266
        %v1268 = vpop.f32.mrf.mxu0
        %1269 = vdwg.mxu0
        %1270 = vmatpush.bf16.msra.mxu0 0
        %1271 = vmatpush.bf16.msra.mxu0 0
        %1272 = vmatpush.bf16.msra.mxu0 0
        %1273 = vmatpush.bf16.msra.mxu0 0
        %1274 = vmatpush.bf16.msra.mxu0 0
        %1275 = vmatpush.bf16.msra.mxu0 0
        %1276 = vmatpush.bf16.msra.mxu0 0
        %1277 = vmatpush.bf16.msra.mxu0 %v1194
        %1278 = vmatmul.bf16.gmra.mxu0 %v1176
        %v1279 = vpop.f32.mrf.mxu0
        %v1280 = vadd.f32 0.0, %v1279
        %v1281 = vpop.f32.mrf.mxu0
        %1282 = vdwg.mxu0
        %1283 = vmatpush.bf16.msra.mxu0 0
        %1284 = vmatpush.bf16.msra.mxu0 0
        %1285 = vmatpush.bf16.msra.mxu0 0
        %1286 = vmatpush.bf16.msra.mxu0 0
        %1287 = vmatpush.bf16.msra.mxu0 0
        %1288 = vmatpush.bf16.msra.mxu0 0
        %1289 = vmatpush.bf16.msra.mxu0 0
        %1290 = vmatpush.bf16.msra.mxu0 %v1197
        %1291 = vmatmul.bf16.gmra.mxu0 %v1176
        %v1292 = vpop.f32.mrf.mxu0
        %v1293 = vadd.f32 0.0, %v1292
        %v1294 = vpop.f32.mrf.mxu0
        %1295 = vdwg.mxu0
        %1296 = vmatpush.bf16.msra.mxu0 0
        %1297 = vmatpush.bf16.msra.mxu0 0
        %1298 = vmatpush.bf16.msra.mxu0 0
        %1299 = vmatpush.bf16.msra.mxu0 0
        %1300 = vmatpush.bf16.msra.mxu0 0
        %1301 = vmatpush.bf16.msra.mxu0 0
        %1302 = vmatpush.bf16.msra.mxu0 0
        %1303 = vmatpush.bf16.msra.mxu0 %v1200
        %1304 = vmatmul.bf16.gmra.mxu0 %v1176
        %v1305 = vpop.f32.mrf.mxu0
        %v1306 = vadd.f32 0.0, %v1305
        %v1307 = vpop.f32.mrf.mxu0
        %1308 = vdwg.mxu0
        %1309 = vmatpush.bf16.msra.mxu0 0
        %1310 = vmatpush.bf16.msra.mxu0 0
        %1311 = vmatpush.bf16.msra.mxu0 0
        %1312 = vmatpush.bf16.msra.mxu0 0
        %1313 = vmatpush.bf16.msra.mxu0 0
        %1314 = vmatpush.bf16.msra.mxu0 0
        %1315 = vmatpush.bf16.msra.mxu0 0
        %1316 = vmatpush.bf16.msra.mxu0 %v1203
        %1317 = vmatmul.bf16.gmra.mxu0 %v1176
        %v1318 = vpop.f32.mrf.mxu0
        %v1319 = vadd.f32 0.0, %v1318
        %v1320 = vpop.f32.mrf.mxu0
        %1321 = vdwg.mxu0
        %v1322 = vadd.f32 %v1092, %v1215
        %v1323 = vadd.f32 %v1093, %v1228
        %v1324 = vadd.f32 %v1094, %v1241
        %v1325 = vadd.f32 %v1095, %v1254
        %v1326 = vadd.f32 %v1096, %v1267
        %v1327 = vadd.f32 %v1097, %v1280
        %v1328 = vadd.f32 %v1098, %v1293
        %v1329 = vadd.f32 %v1099, %v1306
        %v1330 = vadd.f32 %v1100, %v1319
        %1331 = vst [vmem:[#allocation1] ss:$2 sm:$0xff] %v224
        %s1332 = scalar_lea.vmem [#allocation1], 16
        %1333 = vst [vmem:[%s1332] ss:$2 sm:$0xff] %v225
        %s1334 = scalar_lea.vmem [#allocation1], 32
        %1335 = vst [vmem:[%s1334] ss:$2 sm:$0xff] %v226
        %s1336 = scalar_lea.vmem [#allocation1], 48
        %1337 = vst [vmem:[%s1336] ss:$2 sm:$0xff] %v227
        %v1338 = vld.sshfl [vmem:[#allocation1] sm:$0xff pattern:$0x75316420]
        %v1339 = vld.sshfl [vmem:[#allocation1 + $0x8] sm:$0xff pattern:$0x75316420]
        %v1340 = vld.sshfl [vmem:[#allocation1 + $0x10] sm:$0xff pattern:$0x75316420]
        %v1341 = vld.sshfl [vmem:[#allocation1 + $0x18] sm:$0xff pattern:$0x75316420]
        %v1342 = vld.sshfl [vmem:[#allocation1 + $0x20] sm:$0xff pattern:$0x75316420]
        %v1343 = vld.sshfl [vmem:[#allocation1 + $0x28] sm:$0xff pattern:$0x75316420]
        %v1344 = vld.sshfl [vmem:[#allocation1 + $0x30] sm:$0xff pattern:$0x75316420]
        %v1345 = vld.sshfl [vmem:[#allocation1 + $0x38] sm:$0xff pattern:$0x75316420]
        %1346 = vst [vmem:[#allocation1] ss:$2 sm:$0xff] %v228
        %v1347 = vld.sshfl [vmem:[#allocation1] sm:$0xff pattern:$0x75316420]
        %v1357 = vpack.c.bf16 %v1338, %v1338
        %v1358 = vpack.c.bf16 %v1339, %v1339
        %v1359 = vpack.c.bf16 %v1340, %v1340
        %v1360 = vpack.c.bf16 %v1341, %v1341
        %v1361 = vpack.c.bf16 %v1342, %v1342
        %v1362 = vpack.c.bf16 %v1343, %v1343
        %v1363 = vpack.c.bf16 %v1344, %v1344
        %v1364 = vpack.c.bf16 %v1345, %v1345
        %v1365 = vpack.c.bf16 %v1347, %v1347
        %s1366 = scalar_lea.vmem %s1, 40
        %v1367 = vld [vmem:[%s1366] sm:$0xff]
        %v1368 = vpack.c.bf16 %v1367, %v1367
        %1378 = vrot.lane.b32.xlu0 %v1357, 92
        %v1379 = vpop.permute.xlu0 %1378
        %1380 = vrot.lane.b32.xlu0 %v1358, 92
        %v1381 = vpop.permute.xlu0 %1380
        %1382 = vrot.lane.b32.xlu0 %v1359, 92
        %v1383 = vpop.permute.xlu0 %1382
        %1384 = vrot.lane.b32.xlu0 %v1360, 92
        %v1385 = vpop.permute.xlu0 %1384
        %1386 = vrot.lane.b32.xlu0 %v1361, 92
        %v1387 = vpop.permute.xlu0 %1386
        %1388 = vrot.lane.b32.xlu0 %v1362, 92
        %v1389 = vpop.permute.xlu0 %1388
        %1390 = vrot.lane.b32.xlu0 %v1363, 92
        %v1391 = vpop.permute.xlu0 %1390
        %1392 = vrot.lane.b32.xlu0 %v1364, 92
        %v1393 = vpop.permute.xlu0 %1392
        %1394 = vrot.lane.b32.xlu0 %v1365, 92
        %v1395 = vpop.permute.xlu0 %1394
        %vm1396 = vcmask 752640
        %v1397 = vsel %vm1396, %v1379, %v1381
        %v1398 = vsel %vm1396, %v1381, %v1383
        %v1399 = vsel %vm1396, %v1383, %v1385
        %v1400 = vsel %vm1396, %v1385, %v1387
        %v1401 = vsel %vm1396, %v1387, %v1389
        %v1402 = vsel %vm1396, %v1389, %v1391
        %v1403 = vsel %vm1396, %v1391, %v1393
        %v1404 = vsel %vm1396, %v1393, %v1395
        %v1406 = vsel %vm345, %v1368, 0
        %v1409 = vsel %vm349, %v1397, 0
        %v1412 = vsel %vm349, %v1398, 0
        %v1415 = vsel %vm349, %v1399, 0
        %v1418 = vsel %vm349, %v1400, 0
        %v1421 = vsel %vm349, %v1401, 0
        %v1424 = vsel %vm349, %v1402, 0
        %v1427 = vsel %vm349, %v1403, 0
        %v1430 = vsel %vm349, %v1404, 0
        %v1433 = vsel %vm349, %v1395, 0
        %1435 = vmatpush.bf16.msra.mxu0 0
        %1436 = vmatpush.bf16.msra.mxu0 0
        %1437 = vmatpush.bf16.msra.mxu0 0
        %1438 = vmatpush.bf16.msra.mxu0 0
        %1439 = vmatpush.bf16.msra.mxu0 0
        %1440 = vmatpush.bf16.msra.mxu0 0
        %1441 = vmatpush.bf16.msra.mxu0 0
        %1442 = vmatpush.bf16.msra.mxu0 %v1409
        %1443 = vmatmul.bf16.gmra.mxu0 %v1406
        %v1444 = vpop.f32.mrf.mxu0
        %v1445 = vadd.f32 0.0, %v1444
        %v1446 = vpop.f32.mrf.mxu0
        %1447 = vdwg.mxu0
        %1448 = vmatpush.bf16.msra.mxu0 0
        %1449 = vmatpush.bf16.msra.mxu0 0
        %1450 = vmatpush.bf16.msra.mxu0 0
        %1451 = vmatpush.bf16.msra.mxu0 0
        %1452 = vmatpush.bf16.msra.mxu0 0
        %1453 = vmatpush.bf16.msra.mxu0 0
        %1454 = vmatpush.bf16.msra.mxu0 0
        %1455 = vmatpush.bf16.msra.mxu0 %v1412
        %1456 = vmatmul.bf16.gmra.mxu0 %v1406
        %v1457 = vpop.f32.mrf.mxu0
        %v1458 = vadd.f32 0.0, %v1457
        %v1459 = vpop.f32.mrf.mxu0
        %1460 = vdwg.mxu0
        %1461 = vmatpush.bf16.msra.mxu0 0
        %1462 = vmatpush.bf16.msra.mxu0 0
        %1463 = vmatpush.bf16.msra.mxu0 0
        %1464 = vmatpush.bf16.msra.mxu0 0
        %1465 = vmatpush.bf16.msra.mxu0 0
        %1466 = vmatpush.bf16.msra.mxu0 0
        %1467 = vmatpush.bf16.msra.mxu0 0
        %1468 = vmatpush.bf16.msra.mxu0 %v1415
        %1469 = vmatmul.bf16.gmra.mxu0 %v1406
        %v1470 = vpop.f32.mrf.mxu0
        %v1471 = vadd.f32 0.0, %v1470
        %v1472 = vpop.f32.mrf.mxu0
        %1473 = vdwg.mxu0
        %1474 = vmatpush.bf16.msra.mxu0 0
        %1475 = vmatpush.bf16.msra.mxu0 0
        %1476 = vmatpush.bf16.msra.mxu0 0
        %1477 = vmatpush.bf16.msra.mxu0 0
        %1478 = vmatpush.bf16.msra.mxu0 0
        %1479 = vmatpush.bf16.msra.mxu0 0
        %1480 = vmatpush.bf16.msra.mxu0 0
        %1481 = vmatpush.bf16.msra.mxu0 %v1418
        %1482 = vmatmul.bf16.gmra.mxu0 %v1406
        %v1483 = vpop.f32.mrf.mxu0
        %v1484 = vadd.f32 0.0, %v1483
        %v1485 = vpop.f32.mrf.mxu0
        %1486 = vdwg.mxu0
        %1487 = vmatpush.bf16.msra.mxu0 0
        %1488 = vmatpush.bf16.msra.mxu0 0
        %1489 = vmatpush.bf16.msra.mxu0 0
        %1490 = vmatpush.bf16.msra.mxu0 0
        %1491 = vmatpush.bf16.msra.mxu0 0
        %1492 = vmatpush.bf16.msra.mxu0 0
        %1493 = vmatpush.bf16.msra.mxu0 0
        %1494 = vmatpush.bf16.msra.mxu0 %v1421
        %1495 = vmatmul.bf16.gmra.mxu0 %v1406
        %v1496 = vpop.f32.mrf.mxu0
        %v1497 = vadd.f32 0.0, %v1496
        %v1498 = vpop.f32.mrf.mxu0
        %1499 = vdwg.mxu0
        %1500 = vmatpush.bf16.msra.mxu0 0
        %1501 = vmatpush.bf16.msra.mxu0 0
        %1502 = vmatpush.bf16.msra.mxu0 0
        %1503 = vmatpush.bf16.msra.mxu0 0
        %1504 = vmatpush.bf16.msra.mxu0 0
        %1505 = vmatpush.bf16.msra.mxu0 0
        %1506 = vmatpush.bf16.msra.mxu0 0
        %1507 = vmatpush.bf16.msra.mxu0 %v1424
        %1508 = vmatmul.bf16.gmra.mxu0 %v1406
        %v1509 = vpop.f32.mrf.mxu0
        %v1510 = vadd.f32 0.0, %v1509
        %v1511 = vpop.f32.mrf.mxu0
        %1512 = vdwg.mxu0
        %1513 = vmatpush.bf16.msra.mxu0 0
        %1514 = vmatpush.bf16.msra.mxu0 0
        %1515 = vmatpush.bf16.msra.mxu0 0
        %1516 = vmatpush.bf16.msra.mxu0 0
        %1517 = vmatpush.bf16.msra.mxu0 0
        %1518 = vmatpush.bf16.msra.mxu0 0
        %1519 = vmatpush.bf16.msra.mxu0 0
        %1520 = vmatpush.bf16.msra.mxu0 %v1427
        %1521 = vmatmul.bf16.gmra.mxu0 %v1406
        %v1522 = vpop.f32.mrf.mxu0
        %v1523 = vadd.f32 0.0, %v1522
        %v1524 = vpop.f32.mrf.mxu0
        %1525 = vdwg.mxu0
        %1526 = vmatpush.bf16.msra.mxu0 0
        %1527 = vmatpush.bf16.msra.mxu0 0
        %1528 = vmatpush.bf16.msra.mxu0 0
        %1529 = vmatpush.bf16.msra.mxu0 0
        %1530 = vmatpush.bf16.msra.mxu0 0
        %1531 = vmatpush.bf16.msra.mxu0 0
        %1532 = vmatpush.bf16.msra.mxu0 0
        %1533 = vmatpush.bf16.msra.mxu0 %v1430
        %1534 = vmatmul.bf16.gmra.mxu0 %v1406
        %v1535 = vpop.f32.mrf.mxu0
        %v1536 = vadd.f32 0.0, %v1535
        %v1537 = vpop.f32.mrf.mxu0
        %1538 = vdwg.mxu0
        %1539 = vmatpush.bf16.msra.mxu0 0
        %1540 = vmatpush.bf16.msra.mxu0 0
        %1541 = vmatpush.bf16.msra.mxu0 0
        %1542 = vmatpush.bf16.msra.mxu0 0
        %1543 = vmatpush.bf16.msra.mxu0 0
        %1544 = vmatpush.bf16.msra.mxu0 0
        %1545 = vmatpush.bf16.msra.mxu0 0
        %1546 = vmatpush.bf16.msra.mxu0 %v1433
        %1547 = vmatmul.bf16.gmra.mxu0 %v1406
        %v1548 = vpop.f32.mrf.mxu0
        %v1549 = vadd.f32 0.0, %v1548
        %v1550 = vpop.f32.mrf.mxu0
        %1551 = vdwg.mxu0
        %v1552 = vadd.f32 %v1322, %v1445
        %v1553 = vadd.f32 %v1323, %v1458
        %v1554 = vadd.f32 %v1324, %v1471
        %v1555 = vadd.f32 %v1325, %v1484
        %v1556 = vadd.f32 %v1326, %v1497
        %v1557 = vadd.f32 %v1327, %v1510
        %v1558 = vadd.f32 %v1328, %v1523
        %v1559 = vadd.f32 %v1329, %v1536
        %v1560 = vadd.f32 %v1330, %v1549
        %1561 = vst [vmem:[#allocation1] ss:$2 sm:$0xff] %v224
        %s1562 = scalar_lea.vmem [#allocation1], 16
        %1563 = vst [vmem:[%s1562] ss:$2 sm:$0xff] %v225
        %s1564 = scalar_lea.vmem [#allocation1], 32
        %1565 = vst [vmem:[%s1564] ss:$2 sm:$0xff] %v226
        %s1566 = scalar_lea.vmem [#allocation1], 48
        %1567 = vst [vmem:[%s1566] ss:$2 sm:$0xff] %v227
        %v1568 = vld.sshfl [vmem:[#allocation1] sm:$0xff pattern:$0x75316420]
        %v1569 = vld.sshfl [vmem:[#allocation1 + $0x8] sm:$0xff pattern:$0x75316420]
        %v1570 = vld.sshfl [vmem:[#allocation1 + $0x10] sm:$0xff pattern:$0x75316420]
        %v1571 = vld.sshfl [vmem:[#allocation1 + $0x18] sm:$0xff pattern:$0x75316420]
        %v1572 = vld.sshfl [vmem:[#allocation1 + $0x20] sm:$0xff pattern:$0x75316420]
        %v1573 = vld.sshfl [vmem:[#allocation1 + $0x28] sm:$0xff pattern:$0x75316420]
        %v1574 = vld.sshfl [vmem:[#allocation1 + $0x30] sm:$0xff pattern:$0x75316420]
        %v1575 = vld.sshfl [vmem:[#allocation1 + $0x38] sm:$0xff pattern:$0x75316420]
        %1576 = vst [vmem:[#allocation1] ss:$2 sm:$0xff] %v228
        %v1577 = vld.sshfl [vmem:[#allocation1] sm:$0xff pattern:$0x75316420]
        %v1578 = vld.sshfl [vmem:[#allocation1 + $0x8] sm:$0xff pattern:$0x75316420]
        %v1589 = vpack.c.bf16 %v1568, %v1568
        %v1590 = vpack.c.bf16 %v1569, %v1569
        %v1591 = vpack.c.bf16 %v1570, %v1570
        %v1592 = vpack.c.bf16 %v1571, %v1571
        %v1593 = vpack.c.bf16 %v1572, %v1572
        %v1594 = vpack.c.bf16 %v1573, %v1573
        %v1595 = vpack.c.bf16 %v1574, %v1574
        %v1596 = vpack.c.bf16 %v1575, %v1575
        %v1597 = vpack.c.bf16 %v1577, %v1577
        %v1598 = vpack.c.bf16 %v1578, %v1578
        %s1599 = scalar_lea.vmem %s1, 48
        %v1600 = vld [vmem:[%s1599] sm:$0xff]
        %v1601 = vpack.c.bf16 %v1600, %v1600
        %1612 = vrot.lane.b32.xlu0 %v1589, 60
        %v1613 = vpop.permute.xlu0 %1612
        %1614 = vrot.lane.b32.xlu0 %v1590, 60
        %v1615 = vpop.permute.xlu0 %1614
        %1616 = vrot.lane.b32.xlu0 %v1591, 60
        %v1617 = vpop.permute.xlu0 %1616
        %1618 = vrot.lane.b32.xlu0 %v1592, 60
        %v1619 = vpop.permute.xlu0 %1618
        %1620 = vrot.lane.b32.xlu0 %v1593, 60
        %v1621 = vpop.permute.xlu0 %1620
        %1622 = vrot.lane.b32.xlu0 %v1594, 60
        %v1623 = vpop.permute.xlu0 %1622
        %1624 = vrot.lane.b32.xlu0 %v1595, 60
        %v1625 = vpop.permute.xlu0 %1624
        %1626 = vrot.lane.b32.xlu0 %v1596, 60
        %v1627 = vpop.permute.xlu0 %1626
        %1628 = vrot.lane.b32.xlu0 %v1597, 60
        %v1629 = vpop.permute.xlu0 %1628
        %1630 = vrot.lane.b32.xlu0 %v1598, 60
        %v1631 = vpop.permute.xlu0 %1630
        %vm1632 = vcmask 490496
        %v1633 = vsel %vm1632, %v1613, %v1615
        %v1634 = vsel %vm1632, %v1615, %v1617
        %v1635 = vsel %vm1632, %v1617, %v1619
        %v1636 = vsel %vm1632, %v1619, %v1621
        %v1637 = vsel %vm1632, %v1621, %v1623
        %v1638 = vsel %vm1632, %v1623, %v1625
        %v1639 = vsel %vm1632, %v1625, %v1627
        %v1640 = vsel %vm1632, %v1627, %v1629
        %v1641 = vsel %vm1632, %v1629, %v1631
        %v1643 = vsel %vm345, %v1601, 0
        %v1646 = vsel %vm349, %v1633, 0
        %v1649 = vsel %vm349, %v1634, 0
        %v1652 = vsel %vm349, %v1635, 0
        %v1655 = vsel %vm349, %v1636, 0
        %v1658 = vsel %vm349, %v1637, 0
        %v1661 = vsel %vm349, %v1638, 0
        %v1664 = vsel %vm349, %v1639, 0
        %v1667 = vsel %vm349, %v1640, 0
        %v1670 = vsel %vm349, %v1641, 0
        %1672 = vmatpush.bf16.msra.mxu0 0
        %1673 = vmatpush.bf16.msra.mxu0 0
        %1674 = vmatpush.bf16.msra.mxu0 0
        %1675 = vmatpush.bf16.msra.mxu0 0
        %1676 = vmatpush.bf16.msra.mxu0 0
        %1677 = vmatpush.bf16.msra.mxu0 0
        %1678 = vmatpush.bf16.msra.mxu0 0
        %1679 = vmatpush.bf16.msra.mxu0 %v1646
        %1680 = vmatmul.bf16.gmra.mxu0 %v1643
        %v1681 = vpop.f32.mrf.mxu0
        %v1682 = vadd.f32 0.0, %v1681
        %v1683 = vpop.f32.mrf.mxu0
        %1684 = vdwg.mxu0
        %1685 = vmatpush.bf16.msra.mxu0 0
        %1686 = vmatpush.bf16.msra.mxu0 0
        %1687 = vmatpush.bf16.msra.mxu0 0
        %1688 = vmatpush.bf16.msra.mxu0 0
        %1689 = vmatpush.bf16.msra.mxu0 0
        %1690 = vmatpush.bf16.msra.mxu0 0
        %1691 = vmatpush.bf16.msra.mxu0 0
        %1692 = vmatpush.bf16.msra.mxu0 %v1649
        %1693 = vmatmul.bf16.gmra.mxu0 %v1643
        %v1694 = vpop.f32.mrf.mxu0
        %v1695 = vadd.f32 0.0, %v1694
        %v1696 = vpop.f32.mrf.mxu0
        %1697 = vdwg.mxu0
        %1698 = vmatpush.bf16.msra.mxu0 0
        %1699 = vmatpush.bf16.msra.mxu0 0
        %1700 = vmatpush.bf16.msra.mxu0 0
        %1701 = vmatpush.bf16.msra.mxu0 0
        %1702 = vmatpush.bf16.msra.mxu0 0
        %1703 = vmatpush.bf16.msra.mxu0 0
        %1704 = vmatpush.bf16.msra.mxu0 0
        %1705 = vmatpush.bf16.msra.mxu0 %v1652
        %1706 = vmatmul.bf16.gmra.mxu0 %v1643
        %v1707 = vpop.f32.mrf.mxu0
        %v1708 = vadd.f32 0.0, %v1707
        %v1709 = vpop.f32.mrf.mxu0
        %1710 = vdwg.mxu0
        %1711 = vmatpush.bf16.msra.mxu0 0
        %1712 = vmatpush.bf16.msra.mxu0 0
        %1713 = vmatpush.bf16.msra.mxu0 0
        %1714 = vmatpush.bf16.msra.mxu0 0
        %1715 = vmatpush.bf16.msra.mxu0 0
        %1716 = vmatpush.bf16.msra.mxu0 0
        %1717 = vmatpush.bf16.msra.mxu0 0
        %1718 = vmatpush.bf16.msra.mxu0 %v1655
        %1719 = vmatmul.bf16.gmra.mxu0 %v1643
        %v1720 = vpop.f32.mrf.mxu0
        %v1721 = vadd.f32 0.0, %v1720
        %v1722 = vpop.f32.mrf.mxu0
        %1723 = vdwg.mxu0
        %1724 = vmatpush.bf16.msra.mxu0 0
        %1725 = vmatpush.bf16.msra.mxu0 0
        %1726 = vmatpush.bf16.msra.mxu0 0
        %1727 = vmatpush.bf16.msra.mxu0 0
        %1728 = vmatpush.bf16.msra.mxu0 0
        %1729 = vmatpush.bf16.msra.mxu0 0
        %1730 = vmatpush.bf16.msra.mxu0 0
        %1731 = vmatpush.bf16.msra.mxu0 %v1658
        %1732 = vmatmul.bf16.gmra.mxu0 %v1643
        %v1733 = vpop.f32.mrf.mxu0
        %v1734 = vadd.f32 0.0, %v1733
        %v1735 = vpop.f32.mrf.mxu0
        %1736 = vdwg.mxu0
        %1737 = vmatpush.bf16.msra.mxu0 0
        %1738 = vmatpush.bf16.msra.mxu0 0
        %1739 = vmatpush.bf16.msra.mxu0 0
        %1740 = vmatpush.bf16.msra.mxu0 0
        %1741 = vmatpush.bf16.msra.mxu0 0
        %1742 = vmatpush.bf16.msra.mxu0 0
        %1743 = vmatpush.bf16.msra.mxu0 0
        %1744 = vmatpush.bf16.msra.mxu0 %v1661
        %1745 = vmatmul.bf16.gmra.mxu0 %v1643
        %v1746 = vpop.f32.mrf.mxu0
        %v1747 = vadd.f32 0.0, %v1746
        %v1748 = vpop.f32.mrf.mxu0
        %1749 = vdwg.mxu0
        %1750 = vmatpush.bf16.msra.mxu0 0
        %1751 = vmatpush.bf16.msra.mxu0 0
        %1752 = vmatpush.bf16.msra.mxu0 0
        %1753 = vmatpush.bf16.msra.mxu0 0
        %1754 = vmatpush.bf16.msra.mxu0 0
        %1755 = vmatpush.bf16.msra.mxu0 0
        %1756 = vmatpush.bf16.msra.mxu0 0
        %1757 = vmatpush.bf16.msra.mxu0 %v1664
        %1758 = vmatmul.bf16.gmra.mxu0 %v1643
        %v1759 = vpop.f32.mrf.mxu0
        %v1760 = vadd.f32 0.0, %v1759
        %v1761 = vpop.f32.mrf.mxu0
        %1762 = vdwg.mxu0
        %1763 = vmatpush.bf16.msra.mxu0 0
        %1764 = vmatpush.bf16.msra.mxu0 0
        %1765 = vmatpush.bf16.msra.mxu0 0
        %1766 = vmatpush.bf16.msra.mxu0 0
        %1767 = vmatpush.bf16.msra.mxu0 0
        %1768 = vmatpush.bf16.msra.mxu0 0
        %1769 = vmatpush.bf16.msra.mxu0 0
        %1770 = vmatpush.bf16.msra.mxu0 %v1667
        %1771 = vmatmul.bf16.gmra.mxu0 %v1643
        %v1772 = vpop.f32.mrf.mxu0
        %v1773 = vadd.f32 0.0, %v1772
        %v1774 = vpop.f32.mrf.mxu0
        %1775 = vdwg.mxu0
        %1776 = vmatpush.bf16.msra.mxu0 0
        %1777 = vmatpush.bf16.msra.mxu0 0
        %1778 = vmatpush.bf16.msra.mxu0 0
        %1779 = vmatpush.bf16.msra.mxu0 0
        %1780 = vmatpush.bf16.msra.mxu0 0
        %1781 = vmatpush.bf16.msra.mxu0 0
        %1782 = vmatpush.bf16.msra.mxu0 0
        %1783 = vmatpush.bf16.msra.mxu0 %v1670
        %1784 = vmatmul.bf16.gmra.mxu0 %v1643
        %v1785 = vpop.f32.mrf.mxu0
        %v1786 = vadd.f32 0.0, %v1785
        %v1787 = vpop.f32.mrf.mxu0
        %1788 = vdwg.mxu0
        %v1789 = vadd.f32 %v1552, %v1682
        %v1790 = vadd.f32 %v1553, %v1695
        %v1791 = vadd.f32 %v1554, %v1708
        %v1792 = vadd.f32 %v1555, %v1721
        %v1793 = vadd.f32 %v1556, %v1734
        %v1794 = vadd.f32 %v1557, %v1747
        %v1795 = vadd.f32 %v1558, %v1760
        %v1796 = vadd.f32 %v1559, %v1773
        %v1797 = vadd.f32 %v1560, %v1786
        %1798 = vst [vmem:[#allocation1] ss:$2 sm:$0xff] %v224
        %s1799 = scalar_lea.vmem [#allocation1], 16
        %1800 = vst [vmem:[%s1799] ss:$2 sm:$0xff] %v225
        %s1801 = scalar_lea.vmem [#allocation1], 32
        %1802 = vst [vmem:[%s1801] ss:$2 sm:$0xff] %v226
        %s1803 = scalar_lea.vmem [#allocation1], 48
        %1804 = vst [vmem:[%s1803] ss:$2 sm:$0xff] %v227
        %v1805 = vld.sshfl [vmem:[#allocation1] sm:$0xff pattern:$0x75316420]
        %v1806 = vld.sshfl [vmem:[#allocation1 + $0x8] sm:$0xff pattern:$0x75316420]
        %v1807 = vld.sshfl [vmem:[#allocation1 + $0x10] sm:$0xff pattern:$0x75316420]
        %v1808 = vld.sshfl [vmem:[#allocation1 + $0x18] sm:$0xff pattern:$0x75316420]
        %v1809 = vld.sshfl [vmem:[#allocation1 + $0x20] sm:$0xff pattern:$0x75316420]
        %v1810 = vld.sshfl [vmem:[#allocation1 + $0x28] sm:$0xff pattern:$0x75316420]
        %v1811 = vld.sshfl [vmem:[#allocation1 + $0x30] sm:$0xff pattern:$0x75316420]
        %v1812 = vld.sshfl [vmem:[#allocation1 + $0x38] sm:$0xff pattern:$0x75316420]
        %1813 = vst [vmem:[#allocation1] ss:$2 sm:$0xff] %v228
        %v1814 = vld.sshfl [vmem:[#allocation1] sm:$0xff pattern:$0x75316420]
        %v1815 = vld.sshfl [vmem:[#allocation1 + $0x8] sm:$0xff pattern:$0x75316420]
        %v1826 = vpack.c.bf16 %v1805, %v1805
        %v1827 = vpack.c.bf16 %v1806, %v1806
        %v1828 = vpack.c.bf16 %v1807, %v1807
        %v1829 = vpack.c.bf16 %v1808, %v1808
        %v1830 = vpack.c.bf16 %v1809, %v1809
        %v1831 = vpack.c.bf16 %v1810, %v1810
        %v1832 = vpack.c.bf16 %v1811, %v1811
        %v1833 = vpack.c.bf16 %v1812, %v1812
        %v1834 = vpack.c.bf16 %v1814, %v1814
        %v1835 = vpack.c.bf16 %v1815, %v1815
        %s1836 = scalar_lea.vmem %s1, 56
        %v1837 = vld [vmem:[%s1836] sm:$0xff]
        %v1838 = vpack.c.bf16 %v1837, %v1837
        %1849 = vrot.lane.b32.xlu0 %v1826, 59
        %v1850 = vpop.permute.xlu0 %1849
        %1851 = vrot.lane.b32.xlu0 %v1827, 59
        %v1852 = vpop.permute.xlu0 %1851
        %1853 = vrot.lane.b32.xlu0 %v1828, 59
        %v1854 = vpop.permute.xlu0 %1853
        %1855 = vrot.lane.b32.xlu0 %v1829, 59
        %v1856 = vpop.permute.xlu0 %1855
        %1857 = vrot.lane.b32.xlu0 %v1830, 59
        %v1858 = vpop.permute.xlu0 %1857
        %1859 = vrot.lane.b32.xlu0 %v1831, 59
        %v1860 = vpop.permute.xlu0 %1859
        %1861 = vrot.lane.b32.xlu0 %v1832, 59
        %v1862 = vpop.permute.xlu0 %1861
        %1863 = vrot.lane.b32.xlu0 %v1833, 59
        %v1864 = vpop.permute.xlu0 %1863
        %1865 = vrot.lane.b32.xlu0 %v1834, 59
        %v1866 = vpop.permute.xlu0 %1865
        %1867 = vrot.lane.b32.xlu0 %v1835, 59
        %v1868 = vpop.permute.xlu0 %1867
        %vm1869 = vcmask 482304
        %v1870 = vsel %vm1869, %v1850, %v1852
        %v1871 = vsel %vm1869, %v1852, %v1854
        %v1872 = vsel %vm1869, %v1854, %v1856
        %v1873 = vsel %vm1869, %v1856, %v1858
        %v1874 = vsel %vm1869, %v1858, %v1860
        %v1875 = vsel %vm1869, %v1860, %v1862
        %v1876 = vsel %vm1869, %v1862, %v1864
        %v1877 = vsel %vm1869, %v1864, %v1866
        %v1878 = vsel %vm1869, %v1866, %v1868
        %v1880 = vsel %vm345, %v1838, 0
        %v1883 = vsel %vm349, %v1870, 0
        %v1886 = vsel %vm349, %v1871, 0
        %v1889 = vsel %vm349, %v1872, 0
        %v1892 = vsel %vm349, %v1873, 0
        %v1895 = vsel %vm349, %v1874, 0
        %v1898 = vsel %vm349, %v1875, 0
        %v1901 = vsel %vm349, %v1876, 0
        %v1904 = vsel %vm349, %v1877, 0
        %v1907 = vsel %vm349, %v1878, 0
        %1909 = vmatpush.bf16.msra.mxu0 0
        %1910 = vmatpush.bf16.msra.mxu0 0
        %1911 = vmatpush.bf16.msra.mxu0 0
        %1912 = vmatpush.bf16.msra.mxu0 0
        %1913 = vmatpush.bf16.msra.mxu0 0
        %1914 = vmatpush.bf16.msra.mxu0 0
        %1915 = vmatpush.bf16.msra.mxu0 0
        %1916 = vmatpush.bf16.msra.mxu0 %v1883
        %1917 = vmatmul.bf16.gmra.mxu0 %v1880
        %v1918 = vpop.f32.mrf.mxu0
        %v1919 = vadd.f32 0.0, %v1918
        %v1920 = vpop.f32.mrf.mxu0
        %1921 = vdwg.mxu0
        %1922 = vmatpush.bf16.msra.mxu0 0
        %1923 = vmatpush.bf16.msra.mxu0 0
        %1924 = vmatpush.bf16.msra.mxu0 0
        %1925 = vmatpush.bf16.msra.mxu0 0
        %1926 = vmatpush.bf16.msra.mxu0 0
        %1927 = vmatpush.bf16.msra.mxu0 0
        %1928 = vmatpush.bf16.msra.mxu0 0
        %1929 = vmatpush.bf16.msra.mxu0 %v1886
        %1930 = vmatmul.bf16.gmra.mxu0 %v1880
        %v1931 = vpop.f32.mrf.mxu0
        %v1932 = vadd.f32 0.0, %v1931
        %v1933 = vpop.f32.mrf.mxu0
        %1934 = vdwg.mxu0
        %1935 = vmatpush.bf16.msra.mxu0 0
        %1936 = vmatpush.bf16.msra.mxu0 0
        %1937 = vmatpush.bf16.msra.mxu0 0
        %1938 = vmatpush.bf16.msra.mxu0 0
        %1939 = vmatpush.bf16.msra.mxu0 0
        %1940 = vmatpush.bf16.msra.mxu0 0
        %1941 = vmatpush.bf16.msra.mxu0 0
        %1942 = vmatpush.bf16.msra.mxu0 %v1889
        %1943 = vmatmul.bf16.gmra.mxu0 %v1880
        %v1944 = vpop.f32.mrf.mxu0
        %v1945 = vadd.f32 0.0, %v1944
        %v1946 = vpop.f32.mrf.mxu0
        %1947 = vdwg.mxu0
        %1948 = vmatpush.bf16.msra.mxu0 0
        %1949 = vmatpush.bf16.msra.mxu0 0
        %1950 = vmatpush.bf16.msra.mxu0 0
        %1951 = vmatpush.bf16.msra.mxu0 0
        %1952 = vmatpush.bf16.msra.mxu0 0
        %1953 = vmatpush.bf16.msra.mxu0 0
        %1954 = vmatpush.bf16.msra.mxu0 0
        %1955 = vmatpush.bf16.msra.mxu0 %v1892
        %1956 = vmatmul.bf16.gmra.mxu0 %v1880
        %v1957 = vpop.f32.mrf.mxu0
        %v1958 = vadd.f32 0.0, %v1957
        %v1959 = vpop.f32.mrf.mxu0
        %1960 = vdwg.mxu0
        %1961 = vmatpush.bf16.msra.mxu0 0
        %1962 = vmatpush.bf16.msra.mxu0 0
        %1963 = vmatpush.bf16.msra.mxu0 0
        %1964 = vmatpush.bf16.msra.mxu0 0
        %1965 = vmatpush.bf16.msra.mxu0 0
        %1966 = vmatpush.bf16.msra.mxu0 0
        %1967 = vmatpush.bf16.msra.mxu0 0
        %1968 = vmatpush.bf16.msra.mxu0 %v1895
        %1969 = vmatmul.bf16.gmra.mxu0 %v1880
        %v1970 = vpop.f32.mrf.mxu0
        %v1971 = vadd.f32 0.0, %v1970
        %v1972 = vpop.f32.mrf.mxu0
        %1973 = vdwg.mxu0
        %1974 = vmatpush.bf16.msra.mxu0 0
        %1975 = vmatpush.bf16.msra.mxu0 0
        %1976 = vmatpush.bf16.msra.mxu0 0
        %1977 = vmatpush.bf16.msra.mxu0 0
        %1978 = vmatpush.bf16.msra.mxu0 0
        %1979 = vmatpush.bf16.msra.mxu0 0
        %1980 = vmatpush.bf16.msra.mxu0 0
        %1981 = vmatpush.bf16.msra.mxu0 %v1898
        %1982 = vmatmul.bf16.gmra.mxu0 %v1880
        %v1983 = vpop.f32.mrf.mxu0
        %v1984 = vadd.f32 0.0, %v1983
        %v1985 = vpop.f32.mrf.mxu0
        %1986 = vdwg.mxu0
        %1987 = vmatpush.bf16.msra.mxu0 0
        %1988 = vmatpush.bf16.msra.mxu0 0
        %1989 = vmatpush.bf16.msra.mxu0 0
        %1990 = vmatpush.bf16.msra.mxu0 0
        %1991 = vmatpush.bf16.msra.mxu0 0
        %1992 = vmatpush.bf16.msra.mxu0 0
        %1993 = vmatpush.bf16.msra.mxu0 0
        %1994 = vmatpush.bf16.msra.mxu0 %v1901
        %1995 = vmatmul.bf16.gmra.mxu0 %v1880
        %v1996 = vpop.f32.mrf.mxu0
        %v1997 = vadd.f32 0.0, %v1996
        %v1998 = vpop.f32.mrf.mxu0
        %1999 = vdwg.mxu0
        %2000 = vmatpush.bf16.msra.mxu0 0
        %2001 = vmatpush.bf16.msra.mxu0 0
        %2002 = vmatpush.bf16.msra.mxu0 0
        %2003 = vmatpush.bf16.msra.mxu0 0
        %2004 = vmatpush.bf16.msra.mxu0 0
        %2005 = vmatpush.bf16.msra.mxu0 0
        %2006 = vmatpush.bf16.msra.mxu0 0
        %2007 = vmatpush.bf16.msra.mxu0 %v1904
        %2008 = vmatmul.bf16.gmra.mxu0 %v1880
        %v2009 = vpop.f32.mrf.mxu0
        %v2010 = vadd.f32 0.0, %v2009
        %v2011 = vpop.f32.mrf.mxu0
        %2012 = vdwg.mxu0
        %2013 = vmatpush.bf16.msra.mxu0 0
        %2014 = vmatpush.bf16.msra.mxu0 0
        %2015 = vmatpush.bf16.msra.mxu0 0
        %2016 = vmatpush.bf16.msra.mxu0 0
        %2017 = vmatpush.bf16.msra.mxu0 0
        %2018 = vmatpush.bf16.msra.mxu0 0
        %2019 = vmatpush.bf16.msra.mxu0 0
        %2020 = vmatpush.bf16.msra.mxu0 %v1907
        %2021 = vmatmul.bf16.gmra.mxu0 %v1880
        %v2022 = vpop.f32.mrf.mxu0
        %v2023 = vadd.f32 0.0, %v2022
        %v2024 = vpop.f32.mrf.mxu0
        %2025 = vdwg.mxu0
        %v2026 = vadd.f32 %v1789, %v1919
        %v2027 = vadd.f32 %v1790, %v1932
        %v2028 = vadd.f32 %v1791, %v1945
        %v2029 = vadd.f32 %v1792, %v1958
        %v2030 = vadd.f32 %v1793, %v1971
        %v2031 = vadd.f32 %v1794, %v1984
        %v2032 = vadd.f32 %v1795, %v1997
        %v2033 = vadd.f32 %v1796, %v2010
        %v2034 = vadd.f32 %v1797, %v2023
        %2035 = vst [vmem:[#allocation1] ss:$2 sm:$0xff] %v224
        %s2036 = scalar_lea.vmem [#allocation1], 16
        %2037 = vst [vmem:[%s2036] ss:$2 sm:$0xff] %v225
        %s2038 = scalar_lea.vmem [#allocation1], 32
        %2039 = vst [vmem:[%s2038] ss:$2 sm:$0xff] %v226
        %s2040 = scalar_lea.vmem [#allocation1], 48
        %2041 = vst [vmem:[%s2040] ss:$2 sm:$0xff] %v227
        %v2042 = vld.sshfl [vmem:[#allocation1] sm:$0xff pattern:$0x75316420]
        %v2043 = vld.sshfl [vmem:[#allocation1 + $0x8] sm:$0xff pattern:$0x75316420]
        %v2044 = vld.sshfl [vmem:[#allocation1 + $0x10] sm:$0xff pattern:$0x75316420]
        %v2045 = vld.sshfl [vmem:[#allocation1 + $0x18] sm:$0xff pattern:$0x75316420]
        %v2046 = vld.sshfl [vmem:[#allocation1 + $0x20] sm:$0xff pattern:$0x75316420]
        %v2047 = vld.sshfl [vmem:[#allocation1 + $0x28] sm:$0xff pattern:$0x75316420]
        %v2048 = vld.sshfl [vmem:[#allocation1 + $0x30] sm:$0xff pattern:$0x75316420]
        %v2049 = vld.sshfl [vmem:[#allocation1 + $0x38] sm:$0xff pattern:$0x75316420]
        %2050 = vst [vmem:[#allocation1] ss:$2 sm:$0xff] %v228
        %v2051 = vld.sshfl [vmem:[#allocation1] sm:$0xff pattern:$0x75316420]
        %v2052 = vld.sshfl [vmem:[#allocation1 + $0x8] sm:$0xff pattern:$0x75316420]
        %v2063 = vpack.c.bf16 %v2042, %v2042
        %v2064 = vpack.c.bf16 %v2043, %v2043
        %v2065 = vpack.c.bf16 %v2044, %v2044
        %v2066 = vpack.c.bf16 %v2045, %v2045
        %v2067 = vpack.c.bf16 %v2046, %v2046
        %v2068 = vpack.c.bf16 %v2047, %v2047
        %v2069 = vpack.c.bf16 %v2048, %v2048
        %v2070 = vpack.c.bf16 %v2049, %v2049
        %v2071 = vpack.c.bf16 %v2051, %v2051
        %v2072 = vpack.c.bf16 %v2052, %v2052
        %s2073 = scalar_lea.vmem %s1, 64
        %v2074 = vld [vmem:[%s2073] sm:$0xff]
        %v2075 = vpack.c.bf16 %v2074, %v2074
        %2086 = vrot.lane.b32.xlu0 %v2063, 58
        %v2087 = vpop.permute.xlu0 %2086
        %2088 = vrot.lane.b32.xlu0 %v2064, 58
        %v2089 = vpop.permute.xlu0 %2088
        %2090 = vrot.lane.b32.xlu0 %v2065, 58
        %v2091 = vpop.permute.xlu0 %2090
        %2092 = vrot.lane.b32.xlu0 %v2066, 58
        %v2093 = vpop.permute.xlu0 %2092
        %2094 = vrot.lane.b32.xlu0 %v2067, 58
        %v2095 = vpop.permute.xlu0 %2094
        %2096 = vrot.lane.b32.xlu0 %v2068, 58
        %v2097 = vpop.permute.xlu0 %2096
        %2098 = vrot.lane.b32.xlu0 %v2069, 58
        %v2099 = vpop.permute.xlu0 %2098
        %2100 = vrot.lane.b32.xlu0 %v2070, 58
        %v2101 = vpop.permute.xlu0 %2100
        %2102 = vrot.lane.b32.xlu0 %v2071, 58
        %v2103 = vpop.permute.xlu0 %2102
        %2104 = vrot.lane.b32.xlu0 %v2072, 58
        %v2105 = vpop.permute.xlu0 %2104
        %vm2106 = vcmask 474112
        %v2107 = vsel %vm2106, %v2087, %v2089
        %v2108 = vsel %vm2106, %v2089, %v2091
        %v2109 = vsel %vm2106, %v2091, %v2093
        %v2110 = vsel %vm2106, %v2093, %v2095
        %v2111 = vsel %vm2106, %v2095, %v2097
        %v2112 = vsel %vm2106, %v2097, %v2099
        %v2113 = vsel %vm2106, %v2099, %v2101
        %v2114 = vsel %vm2106, %v2101, %v2103
        %v2115 = vsel %vm2106, %v2103, %v2105
        %v2117 = vsel %vm345, %v2075, 0
        %v2120 = vsel %vm349, %v2107, 0
        %v2123 = vsel %vm349, %v2108, 0
        %v2126 = vsel %vm349, %v2109, 0
        %v2129 = vsel %vm349, %v2110, 0
        %v2132 = vsel %vm349, %v2111, 0
        %v2135 = vsel %vm349, %v2112, 0
        %v2138 = vsel %vm349, %v2113, 0
        %v2141 = vsel %vm349, %v2114, 0
        %v2144 = vsel %vm349, %v2115, 0
        %2146 = vmatpush.bf16.msra.mxu0 0
        %2147 = vmatpush.bf16.msra.mxu0 0
        %2148 = vmatpush.bf16.msra.mxu0 0
        %2149 = vmatpush.bf16.msra.mxu0 0
        %2150 = vmatpush.bf16.msra.mxu0 0
        %2151 = vmatpush.bf16.msra.mxu0 0
        %2152 = vmatpush.bf16.msra.mxu0 0
        %2153 = vmatpush.bf16.msra.mxu0 %v2120
        %2154 = vmatmul.bf16.gmra.mxu0 %v2117
        %v2155 = vpop.f32.mrf.mxu0
        %v2156 = vadd.f32 0.0, %v2155
        %v2157 = vpop.f32.mrf.mxu0
        %2158 = vdwg.mxu0
        %2159 = vmatpush.bf16.msra.mxu0 0
        %2160 = vmatpush.bf16.msra.mxu0 0
        %2161 = vmatpush.bf16.msra.mxu0 0
        %2162 = vmatpush.bf16.msra.mxu0 0
        %2163 = vmatpush.bf16.msra.mxu0 0
        %2164 = vmatpush.bf16.msra.mxu0 0
        %2165 = vmatpush.bf16.msra.mxu0 0
        %2166 = vmatpush.bf16.msra.mxu0 %v2123
        %2167 = vmatmul.bf16.gmra.mxu0 %v2117
        %v2168 = vpop.f32.mrf.mxu0
        %v2169 = vadd.f32 0.0, %v2168
        %v2170 = vpop.f32.mrf.mxu0
        %2171 = vdwg.mxu0
        %2172 = vmatpush.bf16.msra.mxu0 0
        %2173 = vmatpush.bf16.msra.mxu0 0
        %2174 = vmatpush.bf16.msra.mxu0 0
        %2175 = vmatpush.bf16.msra.mxu0 0
        %2176 = vmatpush.bf16.msra.mxu0 0
        %2177 = vmatpush.bf16.msra.mxu0 0
        %2178 = vmatpush.bf16.msra.mxu0 0
        %2179 = vmatpush.bf16.msra.mxu0 %v2126
        %2180 = vmatmul.bf16.gmra.mxu0 %v2117
        %v2181 = vpop.f32.mrf.mxu0
        %v2182 = vadd.f32 0.0, %v2181
        %v2183 = vpop.f32.mrf.mxu0
        %2184 = vdwg.mxu0
        %2185 = vmatpush.bf16.msra.mxu0 0
        %2186 = vmatpush.bf16.msra.mxu0 0
        %2187 = vmatpush.bf16.msra.mxu0 0
        %2188 = vmatpush.bf16.msra.mxu0 0
        %2189 = vmatpush.bf16.msra.mxu0 0
        %2190 = vmatpush.bf16.msra.mxu0 0
        %2191 = vmatpush.bf16.msra.mxu0 0
        %2192 = vmatpush.bf16.msra.mxu0 %v2129
        %2193 = vmatmul.bf16.gmra.mxu0 %v2117
        %v2194 = vpop.f32.mrf.mxu0
        %v2195 = vadd.f32 0.0, %v2194
        %v2196 = vpop.f32.mrf.mxu0
        %2197 = vdwg.mxu0
        %2198 = vmatpush.bf16.msra.mxu0 0
        %2199 = vmatpush.bf16.msra.mxu0 0
        %2200 = vmatpush.bf16.msra.mxu0 0
        %2201 = vmatpush.bf16.msra.mxu0 0
        %2202 = vmatpush.bf16.msra.mxu0 0
        %2203 = vmatpush.bf16.msra.mxu0 0
        %2204 = vmatpush.bf16.msra.mxu0 0
        %2205 = vmatpush.bf16.msra.mxu0 %v2132
        %2206 = vmatmul.bf16.gmra.mxu0 %v2117
        %v2207 = vpop.f32.mrf.mxu0
        %v2208 = vadd.f32 0.0, %v2207
        %v2209 = vpop.f32.mrf.mxu0
        %2210 = vdwg.mxu0
        %2211 = vmatpush.bf16.msra.mxu0 0
        %2212 = vmatpush.bf16.msra.mxu0 0
        %2213 = vmatpush.bf16.msra.mxu0 0
        %2214 = vmatpush.bf16.msra.mxu0 0
        %2215 = vmatpush.bf16.msra.mxu0 0
        %2216 = vmatpush.bf16.msra.mxu0 0
        %2217 = vmatpush.bf16.msra.mxu0 0
        %2218 = vmatpush.bf16.msra.mxu0 %v2135
        %2219 = vmatmul.bf16.gmra.mxu0 %v2117
        %v2220 = vpop.f32.mrf.mxu0
        %v2221 = vadd.f32 0.0, %v2220
        %v2222 = vpop.f32.mrf.mxu0
        %2223 = vdwg.mxu0
        %2224 = vmatpush.bf16.msra.mxu0 0
        %2225 = vmatpush.bf16.msra.mxu0 0
        %2226 = vmatpush.bf16.msra.mxu0 0
        %2227 = vmatpush.bf16.msra.mxu0 0
        %2228 = vmatpush.bf16.msra.mxu0 0
        %2229 = vmatpush.bf16.msra.mxu0 0
        %2230 = vmatpush.bf16.msra.mxu0 0
        %2231 = vmatpush.bf16.msra.mxu0 %v2138
        %2232 = vmatmul.bf16.gmra.mxu0 %v2117
        %v2233 = vpop.f32.mrf.mxu0
        %v2234 = vadd.f32 0.0, %v2233
        %v2235 = vpop.f32.mrf.mxu0
        %2236 = vdwg.mxu0
        %2237 = vmatpush.bf16.msra.mxu0 0
        %2238 = vmatpush.bf16.msra.mxu0 0
        %2239 = vmatpush.bf16.msra.mxu0 0
        %2240 = vmatpush.bf16.msra.mxu0 0
        %2241 = vmatpush.bf16.msra.mxu0 0
        %2242 = vmatpush.bf16.msra.mxu0 0
        %2243 = vmatpush.bf16.msra.mxu0 0
        %2244 = vmatpush.bf16.msra.mxu0 %v2141
        %2245 = vmatmul.bf16.gmra.mxu0 %v2117
        %v2246 = vpop.f32.mrf.mxu0
        %v2247 = vadd.f32 0.0, %v2246
        %v2248 = vpop.f32.mrf.mxu0
        %2249 = vdwg.mxu0
        %2250 = vmatpush.bf16.msra.mxu0 0
        %2251 = vmatpush.bf16.msra.mxu0 0
        %2252 = vmatpush.bf16.msra.mxu0 0
        %2253 = vmatpush.bf16.msra.mxu0 0
        %2254 = vmatpush.bf16.msra.mxu0 0
        %2255 = vmatpush.bf16.msra.mxu0 0
        %2256 = vmatpush.bf16.msra.mxu0 0
        %2257 = vmatpush.bf16.msra.mxu0 %v2144
        %2258 = vmatmul.bf16.gmra.mxu0 %v2117
        %v2259 = vpop.f32.mrf.mxu0
        %v2260 = vadd.f32 0.0, %v2259
        %v2261 = vpop.f32.mrf.mxu0
        %2262 = vdwg.mxu0
        %v2263 = vadd.f32 %v2026, %v2156
        %v2264 = vadd.f32 %v2027, %v2169
        %v2265 = vadd.f32 %v2028, %v2182
        %v2266 = vadd.f32 %v2029, %v2195
        %v2267 = vadd.f32 %v2030, %v2208
        %v2268 = vadd.f32 %v2031, %v2221
        %v2269 = vadd.f32 %v2032, %v2234
        %v2270 = vadd.f32 %v2033, %v2247
        %v2271 = vadd.f32 %v2034, %v2260
        %v2272 = vld [vmem:[%s4] sm:$0xff]
        %v2273 = vld [vmem:[%s4 + $0x8] sm:$0x1]
        %v2276 = vperm.slane %v2272, 0
        %v2277 = vperm.slane %v2272, 1
        %v2278 = vperm.slane %v2272, 2
        %v2279 = vperm.slane %v2272, 3
        %v2280 = vperm.slane %v2272, 4
        %v2281 = vperm.slane %v2272, 5
        %v2282 = vperm.slane %v2272, 6
        %v2283 = vperm.slane %v2272, 7
        %v2284 = vperm.slane %v2273, 0
        %v2294 = vmul.f32 %v2263, %v2276
        %v2295 = vmul.f32 %v2264, %v2277
        %v2296 = vmul.f32 %v2265, %v2278
        %v2297 = vmul.f32 %v2266, %v2279
        %v2298 = vmul.f32 %v2267, %v2280
        %v2299 = vmul.f32 %v2268, %v2281
        %v2300 = vmul.f32 %v2269, %v2282
        %v2301 = vmul.f32 %v2270, %v2283
        %v2302 = vmul.f32 %v2271, %v2284
        %v2303 = vadd.f32 %v2294, %v2295
        %v2304 = vadd.f32 %v2303, %v2296
        %v2305 = vadd.f32 %v2304, %v2297
        %v2306 = vadd.f32 %v2305, %v2298
        %v2307 = vadd.f32 %v2306, %v2299
        %v2308 = vadd.f32 %v2307, %v2300
        %v2309 = vadd.f32 %v2308, %v2301
        %vm2310 = vcmask 506880
        %v2311 = vsel %vm2310, %v2302, 0.0
        %v2312 = vadd.f32 %v2309, %v2311
        %2313 = vadd.xlane.f32.xlu0 %v2312
        %v2314 = vpop.xlane.xlu0 %2313
        %v2315 = vmul.f32 %v2314, 0.0009765625
        %v2316 = vsub.f32 %v2263, %v2315
        %v2317 = vsub.f32 %v2264, %v2315
        %v2318 = vsub.f32 %v2265, %v2315
        %v2319 = vsub.f32 %v2266, %v2315
        %v2320 = vsub.f32 %v2267, %v2315
        %v2321 = vsub.f32 %v2268, %v2315
        %v2322 = vsub.f32 %v2269, %v2315
        %v2323 = vsub.f32 %v2270, %v2315
        %v2324 = vsub.f32 %v2271, %v2315
        %v2325 = vmul.f32 %v2316, %v2276
        %v2326 = vmul.f32 %v2317, %v2277
        %v2327 = vmul.f32 %v2318, %v2278
        %v2328 = vmul.f32 %v2319, %v2279
        %v2329 = vmul.f32 %v2320, %v2280
        %v2330 = vmul.f32 %v2321, %v2281
        %v2331 = vmul.f32 %v2322, %v2282
        %v2332 = vmul.f32 %v2323, %v2283
        %v2333 = vmul.f32 %v2324, %v2284
        %v2334 = vmul.f32 %v2325, %v2325
        %v2335 = vmul.f32 %v2326, %v2326
        %v2336 = vmul.f32 %v2327, %v2327
        %v2337 = vmul.f32 %v2328, %v2328
        %v2338 = vmul.f32 %v2329, %v2329
        %v2339 = vmul.f32 %v2330, %v2330
        %v2340 = vmul.f32 %v2331, %v2331
        %v2341 = vmul.f32 %v2332, %v2332
        %v2342 = vmul.f32 %v2333, %v2333
        %v2343 = vadd.f32 %v2334, %v2335
        %v2344 = vadd.f32 %v2343, %v2336
        %v2345 = vadd.f32 %v2344, %v2337
        %v2346 = vadd.f32 %v2345, %v2338
        %v2347 = vadd.f32 %v2346, %v2339
        %v2348 = vadd.f32 %v2347, %v2340
        %v2349 = vadd.f32 %v2348, %v2341
        %v2350 = vsel %vm2310, %v2342, 0.0
        %v2351 = vadd.f32 %v2349, %v2350
        %2352 = vadd.xlane.f32.xlu0 %v2351
        %v2353 = vpop.xlane.xlu0 %2352
        %v2354 = vmul.f32 %v2353, 0.0009765625
        %v2355 = vld [vmem:[%s2] sm:$0xff]
        %v2356 = vadd.f32 %v2354, 1e-05
        %v2357 = vrsqrt.pop %v2356
        %v2358 = vmul.f32 %v2357, %v2356
        %v2359 = vmul.f32 %v2358, %v2357
        %v2360 = vmul.f32 0.5, %v2359
        %v2361 = vsub.f32 1.5, %v2360
        %v2362 = vmul.f32 %v2357, %v2361
        %vm2363 = vweird.f32 %v2356
        %vm2364 = vweird.f32 %v2357
        %vm2365 = vmor %vm2363, %vm2364
        %v2366 = vsel %vm2365, %v2357, %v2362
        %v2367 = vmul.f32 %v2355, %v2366
        %v2368 = vld [vmem:[%s3] sm:$0xff]
        %v2369 = vmul.f32 %v2315, %v2367
        %v2370 = vsub.f32 %v2368, %v2369
        %2372 = vset.pattern.permute.xlu0 0
        %2373 = vperm.xlu0 %2372, %v2367
        %v2374 = vpop.permute.xlu0 %2373
        %v2376 = vmul.f32 %v2263, %v2374
        %v2377 = vmul.f32 %v2264, %v2374
        %v2378 = vmul.f32 %v2265, %v2374
        %v2379 = vmul.f32 %v2266, %v2374
        %v2380 = vmul.f32 %v2267, %v2374
        %v2381 = vmul.f32 %v2268, %v2374
        %v2382 = vmul.f32 %v2269, %v2374
        %v2383 = vmul.f32 %v2270, %v2374
        %v2384 = vmul.f32 %v2271, %v2374
        %2386 = vset.pattern.permute.xlu0 0
        %2387 = vperm.xlu0 %2386, %v2370
        %v2388 = vpop.permute.xlu0 %2387
        %v2390 = vadd.f32 %v2376, %v2388
        %v2391 = vadd.f32 %v2377, %v2388
        %v2392 = vadd.f32 %v2378, %v2388
        %v2393 = vadd.f32 %v2379, %v2388
        %v2394 = vadd.f32 %v2380, %v2388
        %v2395 = vadd.f32 %v2381, %v2388
        %v2396 = vadd.f32 %v2382, %v2388
        %v2397 = vadd.f32 %v2383, %v2388
        %v2398 = vadd.f32 %v2384, %v2388
        %vm2399 = vcmp.gt.f32.partialorder %v2390, 0.0
        %vm2400 = vcmp.gt.f32.partialorder %v2391, 0.0
        %vm2401 = vcmp.gt.f32.partialorder %v2392, 0.0
        %vm2402 = vcmp.gt.f32.partialorder %v2393, 0.0
        %vm2403 = vcmp.gt.f32.partialorder %v2394, 0.0
        %vm2404 = vcmp.gt.f32.partialorder %v2395, 0.0
        %vm2405 = vcmp.gt.f32.partialorder %v2396, 0.0
        %vm2406 = vcmp.gt.f32.partialorder %v2397, 0.0
        %vm2407 = vcmp.gt.f32.partialorder %v2398, 0.0
        %v2408 = vmul.f32 %v2390, 0.01
        %v2409 = vmul.f32 %v2391, 0.01
        %v2410 = vmul.f32 %v2392, 0.01
        %v2411 = vmul.f32 %v2393, 0.01
        %v2412 = vmul.f32 %v2394, 0.01
        %v2413 = vmul.f32 %v2395, 0.01
        %v2414 = vmul.f32 %v2396, 0.01
        %v2415 = vmul.f32 %v2397, 0.01
        %v2416 = vmul.f32 %v2398, 0.01
        %v2417 = vsel %vm2399, %v2390, %v2408
        %v2418 = vsel %vm2400, %v2391, %v2409
        %v2419 = vsel %vm2401, %v2392, %v2410
        %v2420 = vsel %vm2402, %v2393, %v2411
        %v2421 = vsel %vm2403, %v2394, %v2412
        %v2422 = vsel %vm2404, %v2395, %v2413
        %v2423 = vsel %vm2405, %v2396, %v2414
        %v2424 = vsel %vm2406, %v2397, %v2415
        %v2425 = vsel %vm2407, %v2398, %v2416
        %2426 = vst [vmem:[%s217] sm:$0xff] %v2417
        %2427 = vst [vmem:[%s217 + $0x8] sm:$0xff] %v2418
        %2428 = vst [vmem:[%s217 + $0x10] sm:$0xff] %v2419
        %2429 = vst [vmem:[%s217 + $0x18] sm:$0xff] %v2420
        %2430 = vst [vmem:[%s217 + $0x20] sm:$0xff] %v2421
        %2431 = vst [vmem:[%s217 + $0x28] sm:$0xff] %v2422
        %2432 = vst [vmem:[%s217 + $0x30] sm:$0xff] %v2423
        %2433 = vst [vmem:[%s217 + $0x38] sm:$0xff] %v2424
        %2434 = vst.msk [vmem:[%s217 + $0x40] sm:$0xff] %vm2310, %v2425
        %s2435 = sand.u32 %s137, 1
        %s2436 = scalar_lea.sflag [#allocation3], %s2435
        %s2437 = sand.u32 %s137, 1
        %s2438 = smul.addr %s2437, 72
        %s2439 = scalar_lea.vmem [#allocation2], %s2438
        // Predicated region
        $region41: #{tpu_custom_call.1} parent=39 // pred_check
          %p2440 = pneg %p147
        $region42: #{tpu_custom_call.1} parent=39 // pred_check_branch
          %2442 = sbr.rel (%p2440) target = $region44
        $region43: #{tpu_custom_call.1} parent=39 // pred_region
          %2444 = vsyncadd %s2436, 0
          %s2445 = smul.addr %s19, 9
          %s2446 = smul.addr %s2445, 8
          %s2447 = scalar_lea.hbm %s5, %s2446
          %s2449 = sshll.u32 %s2439, 4
          %s2450 = int_to_ptr.vmem [resolvable:$true] %s2449
          %s2451 = sshll.u32 %s2447, 4
          %s2452 = int_to_ptr.hbm [resolvable:$true] %s2451
          %2454 = dma.vmem_to_hbm [thread:$0]  %s2450, 1152, %s2452, %s2436
        $region44: #{tpu_custom_call.1} parent=39 // pred_fallthru
          _
      $region40: #{tpu_custom_call.1} parent=5 // pred_fallthru
        _
      %p2455 = scmp.le.s32.totalorder 2, %s14
      // Predicated region
      $region45: #{tpu_custom_call.1} parent=5 // pred_check
        %p2456 = pneg %p2455
      $region46: #{tpu_custom_call.1} parent=5 // pred_check_branch
        %2458 = sbr.rel (%p2456) target = $region48
      $region47: #{tpu_custom_call.1} parent=5 // pred_region
        %s2459 = ssub.s32 %s14, 2
        // Predicated region
        $region49: #{tpu_custom_call.1} parent=47 // pred_check
          %p2460 = pneg %p153
        $region50: #{tpu_custom_call.1} parent=47 // pred_check_branch
          %2462 = sbr.rel (%p2460) target = $region52
        $region51: #{tpu_custom_call.1} parent=47 // pred_region
          %s2463 = sand.u32 %s138, 1
          %s2464 = scalar_lea.sflag [#allocation3], %s2463
          %s2465 = sand.u32 %s138, 1
          %s2466 = smul.addr %s2465, 72
          %s2467 = scalar_lea.vmem [#allocation2], %s2466
          %2469 = dma.done %s2464, 1152
        $region52: #{tpu_custom_call.1} parent=47 // pred_fallthru
          _
      $region48: #{tpu_custom_call.1} parent=5 // pred_fallthru
        _
    $region6: #{tpu_custom_call.1} parent=1 // loop_footer
      %s18 = sadd.s32 1, %s14
    $region7: #{tpu_custom_call.1} parent=1 // loop_footer_branch
      %13 = sbr.rel target = $region3
    $region8: #{tpu_custom_call.1} parent=1 // loop_exit
      _
    %2470 = vsyncpa [#allocation3], 1
    %s2471 = scalar_lea.sflag [#allocation3], 1
    %2472 = vsyncpa %s2471, 1

</llo_original>
